<compile_context>
chip_gen: v7x
topology: tpu7x:2x2x1
jax: 0.10.0
libtpu: 0.0.40
codegen_flags: <defaults>
</compile_context>

<pallas_src>
import functools
import math

import jax
import jax.numpy as jnp
import numpy as np
from jax.experimental import pallas as pl
from jax.experimental.pallas import tpu as pltpu


def encoder_block_kernel(
    x_ref,      # (S, D)      f32
    wq_ref,     # (H, D, hd)  bf16
    wk_ref,     # (H, D, hd)  bf16
    wv_ref,     # (H, D, hd)  bf16
    bq_ref,     # (H, 1, hd)  f32
    bk_ref,     # (H, 1, hd)  f32
    bv_ref,     # (H, 1, hd)  f32
    wo_ref,     # (H, hd, E)  bf16
    bo_ref,     # (1, E)      f32
    g1_ref,     # (1, D)      f32   LayerNorm1 gamma
    be1_ref,    # (1, D)      f32   LayerNorm1 beta
    w1_ref,     # (D, FF)     bf16
    b1_ref,     # (1, FF)     f32
    w2_ref,     # (FF, D)     bf16
    b2_ref,     # (1, D)      f32
    g2_ref,     # (1, D)      f32   LayerNorm2 gamma
    be2_ref,    # (1, D)      f32   LayerNorm2 beta
    out_ref,    # (S, D)      f32
    att_ref,    # (H, S, S)   f32
    *,
    num_heads: int,
    head_dim: int,
    ff_block: int,
):
    S, D = x_ref.shape
    H, hd = num_heads, head_dim

    x = x_ref[...]                                   # (S, D) f32
    x_bf = x.astype(jnp.bfloat16)
    xh = jnp.broadcast_to(x_bf[None, :, :], (H, S, D))   # (H, S, D) bf16, hoisted once

    # ---- QKV projection, head-batched (no per-head lane slicing) ----------
    q = jnp.einsum("hsd,hdk->hsk", xh, wq_ref[...],
                   preferred_element_type=jnp.float32) + bq_ref[...]   # (H, S, hd)
    k = jnp.einsum("hsd,hdk->hsk", xh, wk_ref[...],
                   preferred_element_type=jnp.float32) + bk_ref[...]
    v = jnp.einsum("hsd,hdk->hsk", xh, wv_ref[...],
                   preferred_element_type=jnp.float32) + bv_ref[...]

    # ---- scaled dot-product attention (all heads at once) -----------------
    scale = 1.0 / math.sqrt(hd)
    logits = jnp.einsum("hqd,hkd->hqk",
                        q.astype(jnp.bfloat16), k.astype(jnp.bfloat16),
                        preferred_element_type=jnp.float32) * scale    # (H, S, S)
    logits = logits - jnp.max(logits, axis=-1, keepdims=True)
    e = jnp.exp(logits)
    denom = jnp.sum(e, axis=-1, keepdims=True)
    attn = e * pl.reciprocal(denom, approx=True)                       # (H, S, S) f32
    att_ref[...] = attn

    vals = jnp.einsum("hqk,hkd->hqd",
                      attn.astype(jnp.bfloat16), v.astype(jnp.bfloat16),
                      preferred_element_type=jnp.float32)              # (H, S, hd)

    # ---- output projection: batched per-head matmul + leading-dim sum -----
    per_head = jnp.einsum("hsd,hde->hse",
                          vals.astype(jnp.bfloat16), wo_ref[...],
                          preferred_element_type=jnp.float32)          # (H, S, E)
    attn_out = jnp.sum(per_head, axis=0) + bo_ref[...]                 # (S, E)

    # ---- residual + LayerNorm1 (f32) ---------------------------------------
    x1 = x + attn_out
    mu1 = jnp.mean(x1, axis=-1, keepdims=True)
    var1 = jnp.mean((x1 - mu1) ** 2, axis=-1, keepdims=True)
    x1n = (x1 - mu1) * jax.lax.rsqrt(var1 + 1e-5)
    x1n = x1n * g1_ref[...] + be1_ref[...]

    # ---- feed-forward: Linear -> GELU(exact) -> Linear, blocked over FF ----
    x1n_bf = x1n.astype(jnp.bfloat16)
    FF = w1_ref.shape[1]
    inv_sqrt2 = 1.0 / math.sqrt(2.0)
    ff_acc = jnp.zeros((S, D), jnp.float32)
    for t in range(FF // ff_block):                     # static, fully unrolled
        lo = t * ff_block
        hi = lo + ff_block
        hdd = jnp.dot(x1n_bf, w1_ref[:, lo:hi],
                      preferred_element_type=jnp.float32) + b1_ref[:, lo:hi]
        gelu = 0.5 * hdd * (1.0 + jax.lax.erf(hdd * inv_sqrt2))
        ff_acc = ff_acc + jnp.dot(gelu.astype(jnp.bfloat16), w2_ref[lo:hi, :],
                                  preferred_element_type=jnp.float32)
    ff = ff_acc + b2_ref[...]

    # ---- residual + LayerNorm2 (f32) ---------------------------------------
    x2 = x1n + ff
    mu2 = jnp.mean(x2, axis=-1, keepdims=True)
    var2 = jnp.mean((x2 - mu2) ** 2, axis=-1, keepdims=True)
    x2n = (x2 - mu2) * jax.lax.rsqrt(var2 + 1e-5)
    out_ref[...] = x2n * g2_ref[...] + be2_ref[...]


def encoder_block(x, params, num_heads, *, ff_tile=512):
    """x: (B, S, D) f32. params: raw PyTorch-layout parameters (see make_params)."""
    B, S, D = x.shape
    E = D
    H = num_heads
    hd = D // H

    wqkv = params["wqkv"]   # (3E, D), per-head interleaved [q_h, k_h, v_h] rows
    bqkv = params["bqkv"]   # (3E,)
    wo = params["wo"]       # (E, E)
    bo = params["bo"]       # (E,)
    w1 = params["w1"]       # (FF, D)
    b1 = params["b1"]       # (FF,)
    w2 = params["w2"]       # (D, FF)
    b2 = params["b2"]       # (D,)
    FF = w1.shape[0]

    # --- wrapper-side weight repacking (head-major, MXU-friendly, bf16) -----
    wqkv_h = wqkv.reshape(H, 3, hd, D)                                  # (H, 3, hd, D)
    wq3 = jnp.transpose(wqkv_h[:, 0], (0, 2, 1)).astype(jnp.bfloat16)   # (H, D, hd)
    wk3 = jnp.transpose(wqkv_h[:, 1], (0, 2, 1)).astype(jnp.bfloat16)
    wv3 = jnp.transpose(wqkv_h[:, 2], (0, 2, 1)).astype(jnp.bfloat16)
    bqkv_h = bqkv.reshape(H, 3, 1, hd).astype(jnp.float32)
    bq3, bk3, bv3 = bqkv_h[:, 0], bqkv_h[:, 1], bqkv_h[:, 2]            # (H, 1, hd)

    wo3 = jnp.transpose(wo, (1, 0)).reshape(H, hd, E).astype(jnp.bfloat16)
    bo2 = bo.reshape(1, E).astype(jnp.float32)

    w1_t = jnp.transpose(w1).astype(jnp.bfloat16)                       # (D, FF)
    b1_2 = b1.reshape(1, FF).astype(jnp.float32)
    w2_t = jnp.transpose(w2).astype(jnp.bfloat16)                       # (FF, D)
    b2_2 = b2.reshape(1, D).astype(jnp.float32)

    g1 = params["g1"].reshape(1, D).astype(jnp.float32)
    be1 = params["be1"].reshape(1, D).astype(jnp.float32)
    g2 = params["g2"].reshape(1, D).astype(jnp.float32)
    be2 = params["be2"].reshape(1, D).astype(jnp.float32)

    ff_block = ff_tile
    if FF < ff_block or FF % ff_block != 0:
        ff_block = FF

    kernel = functools.partial(
        encoder_block_kernel, num_heads=H, head_dim=hd, ff_block=ff_block
    )

    operands = (wq3, wk3, wv3, bq3, bk3, bv3, wo3, bo2,
                g1, be1, w1_t, b1_2, w2_t, b2_2, g2, be2)

    def full_spec(shape):
        nd = len(shape)
        return pl.BlockSpec(shape, lambda b, _nd=nd: (0,) * _nd)

    in_specs = [pl.BlockSpec((None, S, D), lambda b: (b, 0, 0))]        # x (squeezed batch)
    in_specs += [full_spec(op.shape) for op in operands]

    out_specs = [
        pl.BlockSpec((None, S, D), lambda b: (b, 0, 0)),                # out
        pl.BlockSpec((None, H, S, S), lambda b: (b, 0, 0, 0)),          # att
    ]
    out_shapes = (
        jax.ShapeDtypeStruct((B, S, D), jnp.float32),
        jax.ShapeDtypeStruct((B, H, S, S), jnp.float32),
    )

    # --- explicit VMEM budget from the computed per-step footprint ----------
    weight_bytes = sum(int(np.prod(op.shape)) * op.dtype.itemsize for op in operands)
    block_bytes = (2 * S * D + H * S * S) * 4                   # x/out/att blocks
    interm_bytes = (2 * H * S * S + 4 * H * S * hd + H * S * E + S * ff_block + 4 * S * D) * 4
    vmem_limit = int(min(max(2 * (weight_bytes + block_bytes) + interm_bytes,
                             16 * 1024 * 1024),
                         64 * 1024 * 1024))

    fn = pl.pallas_call(
        kernel,
        out_shape=out_shapes,
        grid_spec=pltpu.PrefetchScalarGridSpec(
            num_scalar_prefetch=0,
            grid=(B,),
            in_specs=in_specs,
            out_specs=out_specs,
        ),
        compiler_params=pltpu.CompilerParams(
            dimension_semantics=("parallel",),      # batch elems are independent -> megacore
            vmem_limit_bytes=vmem_limit,
        ),
    )
    return fn(x, *operands)


# ----------------------------- reference (pure JAX, f32) -------------------
def encoder_block_ref(x, params, num_heads):
    B, S, D = x.shape
    H = num_heads
    hd = D // H
    qkv = x @ params["wqkv"].T + params["bqkv"]                   # (B, S, 3E)
    qkv = qkv.reshape(B, S, H, 3 * hd).transpose(0, 2, 1, 3)
    q, k, v = jnp.split(qkv, 3, axis=-1)
    logits = jnp.einsum("bhqd,bhkd->bhqk", q, k) / math.sqrt(hd)
    att = jax.nn.softmax(logits, axis=-1)
    vals = jnp.einsum("bhqk,bhkd->bhqd", att, v)
    vals = vals.transpose(0, 2, 1, 3).reshape(B, S, D)
    attn_out = vals @ params["wo"].T + params["bo"]

    def ln(y, g, b):
        mu = jnp.mean(y, axis=-1, keepdims=True)
        var = jnp.mean((y - mu) ** 2, axis=-1, keepdims=True)
        return (y - mu) / jnp.sqrt(var + 1e-5) * g + b

    x1 = ln(x + attn_out, params["g1"], params["be1"])
    h = x1 @ params["w1"].T + params["b1"]
    g = 0.5 * h * (1.0 + jax.lax.erf(h / math.sqrt(2.0)))
    ff = g @ params["w2"].T + params["b2"]
    x2 = ln(x1 + ff, params["g2"], params["be2"])
    return x2, att


def make_params(key, D, num_heads, FF):
    ks = jax.random.split(key, 6)

    def xavier(k, fan_out, fan_in):
        lim = math.sqrt(6.0 / (fan_in + fan_out))
        return jax.random.uniform(k, (fan_out, fan_in), jnp.float32, -lim, lim)

    return {
        "wqkv": xavier(ks[0], 3 * D, D),          # (3E, D), PyTorch Linear.weight layout
        "bqkv": jnp.zeros((3 * D,), jnp.float32),
        "wo": xavier(ks[1], D, D),
        "bo": jnp.zeros((D,), jnp.float32),
        "w1": xavier(ks[2], FF, D),
        "b1": jax.random.uniform(ks[4], (FF,), jnp.float32, -0.05, 0.05),
        "w2": xavier(ks[3], D, FF),
        "b2": jax.random.uniform(ks[5], (D,), jnp.float32, -0.05, 0.05),
        "g1": jnp.ones((D,), jnp.float32),
        "be1": jnp.zeros((D,), jnp.float32),
        "g2": jnp.ones((D,), jnp.float32),
        "be2": jnp.zeros((D,), jnp.float32),
    }


if __name__ == "__main__":
    B, S, D = 2, 8, 32
    num_heads = 4
    FF = 4 * D

    key = jax.random.PRNGKey(0)
    kx, kp = jax.random.split(key)
    x = jax.random.normal(kx, (B, S, D), jnp.float32)
    params = make_params(kp, D, num_heads, FF)

    out, att = encoder_block(x, params, num_heads)
    out = jax.block_until_ready(out)
    att = jax.block_until_ready(att)

    out_ref, att_ref = encoder_block_ref(x, params, num_heads)
    # bf16 matmul inputs (f32 accumulation) -> loosened tolerances vs the f32 reference.
    np.testing.assert_allclose(np.asarray(out), np.asarray(out_ref), rtol=3e-2, atol=3e-2)
    np.testing.assert_allclose(np.asarray(att), np.asarray(att_ref), rtol=3e-2, atol=3e-2)

    print("KERNEL_OK")
</pallas_src>

<mosaic_0001>
module attributes {stable_mosaic.version = 11 : i64} {
  func.func @encoder_block_kernel(%arg0: i32, %arg1: memref<1x8x32xf32, #tpu.memory_space<vmem>>, %arg2: memref<4x32x8xbf16, #tpu.memory_space<vmem>>, %arg3: memref<4x32x8xbf16, #tpu.memory_space<vmem>>, %arg4: memref<4x32x8xbf16, #tpu.memory_space<vmem>>, %arg5: memref<4x1x8xf32, #tpu.memory_space<vmem>>, %arg6: memref<4x1x8xf32, #tpu.memory_space<vmem>>, %arg7: memref<4x1x8xf32, #tpu.memory_space<vmem>>, %arg8: memref<4x8x32xbf16, #tpu.memory_space<vmem>>, %arg9: memref<1x32xf32, #tpu.memory_space<vmem>>, %arg10: memref<1x32xf32, #tpu.memory_space<vmem>>, %arg11: memref<1x32xf32, #tpu.memory_space<vmem>>, %arg12: memref<32x128xbf16, #tpu.memory_space<vmem>>, %arg13: memref<1x128xf32, #tpu.memory_space<vmem>>, %arg14: memref<128x32xbf16, #tpu.memory_space<vmem>>, %arg15: memref<1x32xf32, #tpu.memory_space<vmem>>, %arg16: memref<1x32xf32, #tpu.memory_space<vmem>>, %arg17: memref<1x32xf32, #tpu.memory_space<vmem>>, %arg18: memref<1x8x32xf32, #tpu.memory_space<vmem>>, %arg19: memref<1x4x8x8xf32, #tpu.memory_space<vmem>>) attributes {dimension_semantics = [#tpu.dimension_semantics<parallel>], iteration_bounds = array<i64: 2>, scalar_prefetch = 0 : i64, scratch_operands = 0 : i64, tpu.core_type = #tpu.core_type<tc>, window_params = [{transform_indices = @transform_0, window_bounds = array<i64: 1, 8, 32>}, {pipeline_mode = #tpu.pipeline_mode<synchronous>, transform_indices = @transform_1, window_bounds = array<i64: 4, 32, 8>}, {pipeline_mode = #tpu.pipeline_mode<synchronous>, transform_indices = @transform_2, window_bounds = array<i64: 4, 32, 8>}, {pipeline_mode = #tpu.pipeline_mode<synchronous>, transform_indices = @transform_3, window_bounds = array<i64: 4, 32, 8>}, {pipeline_mode = #tpu.pipeline_mode<synchronous>, transform_indices = @transform_4, window_bounds = array<i64: 4, 1, 8>}, {pipeline_mode = #tpu.pipeline_mode<synchronous>, transform_indices = @transform_5, window_bounds = array<i64: 4, 1, 8>}, {pipeline_mode = #tpu.pipeline_mode<synchronous>, transform_indices = @transform_6, window_bounds = array<i64: 4, 1, 8>}, {pipeline_mode = #tpu.pipeline_mode<synchronous>, transform_indices = @transform_7, window_bounds = array<i64: 4, 8, 32>}, {pipeline_mode = #tpu.pipeline_mode<synchronous>, transform_indices = @transform_8, window_bounds = array<i64: 1, 32>}, {pipeline_mode = #tpu.pipeline_mode<synchronous>, transform_indices = @transform_9, window_bounds = array<i64: 1, 32>}, {pipeline_mode = #tpu.pipeline_mode<synchronous>, transform_indices = @transform_10, window_bounds = array<i64: 1, 32>}, {pipeline_mode = #tpu.pipeline_mode<synchronous>, transform_indices = @transform_11, window_bounds = array<i64: 32, 128>}, {pipeline_mode = #tpu.pipeline_mode<synchronous>, transform_indices = @transform_12, window_bounds = array<i64: 1, 128>}, {pipeline_mode = #tpu.pipeline_mode<synchronous>, transform_indices = @transform_13, window_bounds = array<i64: 128, 32>}, {pipeline_mode = #tpu.pipeline_mode<synchronous>, transform_indices = @transform_14, window_bounds = array<i64: 1, 32>}, {pipeline_mode = #tpu.pipeline_mode<synchronous>, transform_indices = @transform_15, window_bounds = array<i64: 1, 32>}, {pipeline_mode = #tpu.pipeline_mode<synchronous>, transform_indices = @transform_16, window_bounds = array<i64: 1, 32>}, {transform_indices = @transform_17, window_bounds = array<i64: 1, 8, 32>}, {transform_indices = @transform_18, window_bounds = array<i64: 1, 4, 8, 8>}]} {
    %c0 = arith.constant 0 : index
    %c0_0 = arith.constant 0 : index
    %c0_1 = arith.constant 0 : index
    %0 = vector.load %arg1[%c0, %c0_0, %c0_1] : memref<1x8x32xf32, #tpu.memory_space<vmem>>, vector<1x8x32xf32>
    %1 = vector.shape_cast %0 : vector<1x8x32xf32> to vector<8x32xf32>
    %2 = arith.truncf %1 : vector<8x32xf32> to vector<8x32xbf16>
    %3 = vector.shape_cast %2 : vector<8x32xbf16> to vector<1x8x32xbf16>
    %4 = vector.shape_cast %3 : vector<1x8x32xbf16> to vector<1x8x32xbf16>
    %5 = vector.broadcast %4 : vector<1x8x32xbf16> to vector<4x8x32xbf16>
    %c0_2 = arith.constant 0 : index
    %c0_3 = arith.constant 0 : index
    %c0_4 = arith.constant 0 : index
    %6 = vector.load %arg2[%c0_2, %c0_3, %c0_4] : memref<4x32x8xbf16, #tpu.memory_space<vmem>>, vector<4x32x8xbf16>
    "tpu.trace_start"() <{level = 10 : i32, message = "hsd,hdk->hsk"}> : () -> ()
    %cst = arith.constant dense<0.000000e+00> : vector<4x8x8xf32>
    %7 = tpu.matmul %5, %6, %cst {dimension_numbers = #tpu.dot_dimension_numbers<[2], [1], [1], [2], [0, 0, 0, 1, 1, 2], [0], [0]>} : vector<4x8x32xbf16>, vector<4x32x8xbf16>, vector<4x8x8xf32> -> vector<4x8x8xf32>
    "tpu.trace_stop"() : () -> ()
    %c0_5 = arith.constant 0 : index
    %c0_6 = arith.constant 0 : index
    %c0_7 = arith.constant 0 : index
    %8 = vector.load %arg5[%c0_5, %c0_6, %c0_7] : memref<4x1x8xf32, #tpu.memory_space<vmem>>, vector<4x1x8xf32>
    %9 = vector.broadcast %8 : vector<4x1x8xf32> to vector<4x8x8xf32>
    %10 = arith.addf %7, %9 : vector<4x8x8xf32>
    %c0_8 = arith.constant 0 : index
    %c0_9 = arith.constant 0 : index
    %c0_10 = arith.constant 0 : index
    %11 = vector.load %arg3[%c0_8, %c0_9, %c0_10] : memref<4x32x8xbf16, #tpu.memory_space<vmem>>, vector<4x32x8xbf16>
    "tpu.trace_start"() <{level = 10 : i32, message = "hsd,hdk->hsk"}> : () -> ()
    %cst_11 = arith.constant dense<0.000000e+00> : vector<4x8x8xf32>
    %12 = tpu.matmul %5, %11, %cst_11 {dimension_numbers = #tpu.dot_dimension_numbers<[2], [1], [1], [2], [0, 0, 0, 1, 1, 2], [0], [0]>} : vector<4x8x32xbf16>, vector<4x32x8xbf16>, vector<4x8x8xf32> -> vector<4x8x8xf32>
    "tpu.trace_stop"() : () -> ()
    %c0_12 = arith.constant 0 : index
    %c0_13 = arith.constant 0 : index
    %c0_14 = arith.constant 0 : index
    %13 = vector.load %arg6[%c0_12, %c0_13, %c0_14] : memref<4x1x8xf32, #tpu.memory_space<vmem>>, vector<4x1x8xf32>
    %14 = vector.broadcast %13 : vector<4x1x8xf32> to vector<4x8x8xf32>
    %15 = arith.addf %12, %14 : vector<4x8x8xf32>
    %c0_15 = arith.constant 0 : index
    %c0_16 = arith.constant 0 : index
    %c0_17 = arith.constant 0 : index
    %16 = vector.load %arg4[%c0_15, %c0_16, %c0_17] : memref<4x32x8xbf16, #tpu.memory_space<vmem>>, vector<4x32x8xbf16>
    "tpu.trace_start"() <{level = 10 : i32, message = "hsd,hdk->hsk"}> : () -> ()
    %cst_18 = arith.constant dense<0.000000e+00> : vector<4x8x8xf32>
    %17 = tpu.matmul %5, %16, %cst_18 {dimension_numbers = #tpu.dot_dimension_numbers<[2], [1], [1], [2], [0, 0, 0, 1, 1, 2], [0], [0]>} : vector<4x8x32xbf16>, vector<4x32x8xbf16>, vector<4x8x8xf32> -> vector<4x8x8xf32>
    "tpu.trace_stop"() : () -> ()
    %c0_19 = arith.constant 0 : index
    %c0_20 = arith.constant 0 : index
    %c0_21 = arith.constant 0 : index
    %18 = vector.load %arg7[%c0_19, %c0_20, %c0_21] : memref<4x1x8xf32, #tpu.memory_space<vmem>>, vector<4x1x8xf32>
    %19 = vector.broadcast %18 : vector<4x1x8xf32> to vector<4x8x8xf32>
    %20 = arith.addf %17, %19 : vector<4x8x8xf32>
    %21 = arith.truncf %10 : vector<4x8x8xf32> to vector<4x8x8xbf16>
    %22 = arith.truncf %15 : vector<4x8x8xf32> to vector<4x8x8xbf16>
    "tpu.trace_start"() <{level = 10 : i32, message = "hqd,hkd->hqk"}> : () -> ()
    %cst_22 = arith.constant dense<0.000000e+00> : vector<4x8x8xf32>
    %23 = tpu.matmul %21, %22, %cst_22 {dimension_numbers = #tpu.dot_dimension_numbers<[2], [2], [1], [1], [0, 0, 0, 1, 1, 1], [0], [0]>} : vector<4x8x8xbf16>, vector<4x8x8xbf16>, vector<4x8x8xf32> -> vector<4x8x8xf32>
    "tpu.trace_stop"() : () -> ()
    %cst_23 = arith.constant 0.353553385 : f32
    %24 = vector.broadcast %cst_23 : f32 to vector<4x8x8xf32>
    %25 = arith.mulf %23, %24 : vector<4x8x8xf32>
    %cst_24 = arith.constant dense<0xFF800000> : vector<4x8xf32>
    %26 = vector.multi_reduction <maximumf>, %25, %cst_24 [2] : vector<4x8x8xf32> to vector<4x8xf32>
    %27 = vector.shape_cast %26 : vector<4x8xf32> to vector<4x8x1xf32>
    %28 = vector.broadcast %27 : vector<4x8x1xf32> to vector<4x8x8xf32>
    %29 = arith.subf %25, %28 : vector<4x8x8xf32>
    %30 = math.exp %29 : vector<4x8x8xf32>
    %cst_25 = arith.constant dense<0.000000e+00> : vector<4x8xf32>
    %31 = vector.multi_reduction <add>, %30, %cst_25 [2] : vector<4x8x8xf32> to vector<4x8xf32>
    %32 = vector.shape_cast %31 : vector<4x8xf32> to vector<4x8x1xf32>
    %33 = tpu.reciprocal %32 {approx = true} : vector<4x8x1xf32> -> vector<4x8x1xf32>
    %34 = vector.broadcast %33 : vector<4x8x1xf32> to vector<4x8x8xf32>
    %35 = arith.mulf %30, %34 : vector<4x8x8xf32>
    %c0_26 = arith.constant 0 : index
    %c0_27 = arith.constant 0 : index
    %c0_28 = arith.constant 0 : index
    %c0_29 = arith.constant 0 : index
    %36 = vector.load %arg19[%c0_26, %c0_27, %c0_28, %c0_29] : memref<1x4x8x8xf32, #tpu.memory_space<vmem>>, vector<1x4x8x8xf32>
    %37 = vector.shape_cast %36 : vector<1x4x8x8xf32> to vector<4x8x8xf32>
    %38 = vector.shape_cast %35 : vector<4x8x8xf32> to vector<1x4x8x8xf32>
    tpu.vector_store %arg19[%c0_26, %c0_27, %c0_28, %c0_29], %38 {strides = array<i32>} : memref<1x4x8x8xf32, #tpu.memory_space<vmem>>, vector<1x4x8x8xf32>,
    %39 = arith.truncf %35 : vector<4x8x8xf32> to vector<4x8x8xbf16>
    %40 = arith.truncf %20 : vector<4x8x8xf32> to vector<4x8x8xbf16>
    "tpu.trace_start"() <{level = 10 : i32, message = "hqk,hkd->hqd"}> : () -> ()
    %cst_30 = arith.constant dense<0.000000e+00> : vector<4x8x8xf32>
    %41 = tpu.matmul %39, %40, %cst_30 {dimension_numbers = #tpu.dot_dimension_numbers<[2], [1], [1], [2], [0, 0, 0, 1, 1, 2], [0], [0]>} : vector<4x8x8xbf16>, vector<4x8x8xbf16>, vector<4x8x8xf32> -> vector<4x8x8xf32>
    "tpu.trace_stop"() : () -> ()
    %42 = arith.truncf %41 : vector<4x8x8xf32> to vector<4x8x8xbf16>
    %c0_31 = arith.constant 0 : index
    %c0_32 = arith.constant 0 : index
    %c0_33 = arith.constant 0 : index
    %43 = vector.load %arg8[%c0_31, %c0_32, %c0_33] : memref<4x8x32xbf16, #tpu.memory_space<vmem>>, vector<4x8x32xbf16>
    "tpu.trace_start"() <{level = 10 : i32, message = "hsd,hde->hse"}> : () -> ()
    %cst_34 = arith.constant dense<0.000000e+00> : vector<4x8x32xf32>
    %44 = tpu.matmul %42, %43, %cst_34 {dimension_numbers = #tpu.dot_dimension_numbers<[2], [1], [1], [2], [0, 0, 0, 1, 1, 2], [0], [0]>} : vector<4x8x8xbf16>, vector<4x8x32xbf16>, vector<4x8x32xf32> -> vector<4x8x32xf32>
    "tpu.trace_stop"() : () -> ()
    %cst_35 = arith.constant dense<0.000000e+00> : vector<8x32xf32>
    %45 = vector.multi_reduction <add>, %44, %cst_35 [0] : vector<4x8x32xf32> to vector<8x32xf32>
    %c0_36 = arith.constant 0 : index
    %c0_37 = arith.constant 0 : index
    %46 = vector.load %arg9[%c0_36, %c0_37] : memref<1x32xf32, #tpu.memory_space<vmem>>, vector<1x32xf32>
    %47 = vector.broadcast %46 : vector<1x32xf32> to vector<8x32xf32>
    %48 = arith.addf %45, %47 : vector<8x32xf32>
    %49 = arith.addf %1, %48 : vector<8x32xf32>
    %cst_38 = arith.constant dense<0.000000e+00> : vector<8xf32>
    %50 = vector.multi_reduction <add>, %49, %cst_38 [1] : vector<8x32xf32> to vector<8xf32>
    %51 = vector.shape_cast %50 : vector<8xf32> to vector<8x1xf32>
    %cst_39 = arith.constant 3.200000e+01 : f32
    %52 = vector.broadcast %cst_39 : f32 to vector<8x1xf32>
    %53 = arith.divf %51, %52 : vector<8x1xf32>
    %54 = vector.broadcast %53 : vector<8x1xf32> to vector<8x32xf32>
    %55 = arith.subf %49, %54 : vector<8x32xf32>
    %56 = arith.mulf %55, %55 : vector<8x32xf32>
    %cst_40 = arith.constant dense<0.000000e+00> : vector<8xf32>
    %57 = vector.multi_reduction <add>, %56, %cst_40 [1] : vector<8x32xf32> to vector<8xf32>
    %58 = vector.shape_cast %57 : vector<8xf32> to vector<8x1xf32>
    %cst_41 = arith.constant 3.200000e+01 : f32
    %59 = vector.broadcast %cst_41 : f32 to vector<8x1xf32>
    %60 = arith.divf %58, %59 : vector<8x1xf32>
    %61 = vector.broadcast %53 : vector<8x1xf32> to vector<8x32xf32>
    %62 = arith.subf %49, %61 : vector<8x32xf32>
    %cst_42 = arith.constant 9.99999974E-6 : f32
    %63 = vector.broadcast %cst_42 : f32 to vector<8x1xf32>
    %64 = arith.addf %60, %63 : vector<8x1xf32>
    %65 = math.rsqrt %64 : vector<8x1xf32>
    %66 = vector.broadcast %65 : vector<8x1xf32> to vector<8x32xf32>
    %67 = arith.mulf %62, %66 : vector<8x32xf32>
    %c0_43 = arith.constant 0 : index
    %c0_44 = arith.constant 0 : index
    %68 = vector.load %arg10[%c0_43, %c0_44] : memref<1x32xf32, #tpu.memory_space<vmem>>, vector<1x32xf32>
    %69 = vector.broadcast %68 : vector<1x32xf32> to vector<8x32xf32>
    %70 = arith.mulf %67, %69 : vector<8x32xf32>
    %c0_45 = arith.constant 0 : index
    %c0_46 = arith.constant 0 : index
    %71 = vector.load %arg11[%c0_45, %c0_46] : memref<1x32xf32, #tpu.memory_space<vmem>>, vector<1x32xf32>
    %72 = vector.broadcast %71 : vector<1x32xf32> to vector<8x32xf32>
    %73 = arith.addf %70, %72 : vector<8x32xf32>
    %74 = arith.truncf %73 : vector<8x32xf32> to vector<8x32xbf16>
    %cst_47 = arith.constant 0.000000e+00 : f32
    %75 = vector.broadcast %cst_47 : f32 to vector<8x32xf32>
    %c0_48 = arith.constant 0 : index
    %c0_49 = arith.constant 0 : index
    %76 = vector.load %arg12[%c0_48, %c0_49] : memref<32x128xbf16, #tpu.memory_space<vmem>>, vector<32x128xbf16>
    %cst_50 = arith.constant dense<0.000000e+00> : vector<8x128xf32>
    %77 = tpu.matmul %74, %76, %cst_50 {dimension_numbers = #tpu.dot_dimension_numbers<[1], [0], [0], [1], [0, 0, 1, 1], [], []>} : vector<8x32xbf16>, vector<32x128xbf16>, vector<8x128xf32> -> vector<8x128xf32>
    %c0_51 = arith.constant 0 : index
    %c0_52 = arith.constant 0 : index
    %78 = vector.load %arg13[%c0_51, %c0_52] : memref<1x128xf32, #tpu.memory_space<vmem>>, vector<1x128xf32>
    %79 = vector.broadcast %78 : vector<1x128xf32> to vector<8x128xf32>
    %80 = arith.addf %77, %79 : vector<8x128xf32>
    %cst_53 = arith.constant 5.000000e-01 : f32
    %81 = vector.broadcast %cst_53 : f32 to vector<8x128xf32>
    %82 = arith.mulf %81, %80 : vector<8x128xf32>
    %cst_54 = arith.constant 0.707106769 : f32
    %83 = vector.broadcast %cst_54 : f32 to vector<8x128xf32>
    %84 = arith.mulf %80, %83 : vector<8x128xf32>
    %85 = math.erf %84 : vector<8x128xf32>
    %cst_55 = arith.constant 1.000000e+00 : f32
    %86 = vector.broadcast %cst_55 : f32 to vector<8x128xf32>
    %87 = arith.addf %86, %85 : vector<8x128xf32>
    %88 = arith.mulf %82, %87 : vector<8x128xf32>
    %89 = arith.truncf %88 : vector<8x128xf32> to vector<8x128xbf16>
    %c0_56 = arith.constant 0 : index
    %c0_57 = arith.constant 0 : index
    %90 = vector.load %arg14[%c0_56, %c0_57] : memref<128x32xbf16, #tpu.memory_space<vmem>>, vector<128x32xbf16>
    %cst_58 = arith.constant dense<0.000000e+00> : vector<8x32xf32>
    %91 = tpu.matmul %89, %90, %cst_58 {dimension_numbers = #tpu.dot_dimension_numbers<[1], [0], [0], [1], [0, 0, 1, 1], [], []>} : vector<8x128xbf16>, vector<128x32xbf16>, vector<8x32xf32> -> vector<8x32xf32>
    %92 = arith.addf %75, %91 : vector<8x32xf32>
    %c0_59 = arith.constant 0 : index
    %c0_60 = arith.constant 0 : index
    %93 = vector.load %arg15[%c0_59, %c0_60] : memref<1x32xf32, #tpu.memory_space<vmem>>, vector<1x32xf32>
    %94 = vector.broadcast %93 : vector<1x32xf32> to vector<8x32xf32>
    %95 = arith.addf %92, %94 : vector<8x32xf32>
    %96 = arith.addf %73, %95 : vector<8x32xf32>
    %cst_61 = arith.constant dense<0.000000e+00> : vector<8xf32>
    %97 = vector.multi_reduction <add>, %96, %cst_61 [1] : vector<8x32xf32> to vector<8xf32>
    %98 = vector.shape_cast %97 : vector<8xf32> to vector<8x1xf32>
    %cst_62 = arith.constant 3.200000e+01 : f32
    %99 = vector.broadcast %cst_62 : f32 to vector<8x1xf32>
    %100 = arith.divf %98, %99 : vector<8x1xf32>
    %101 = vector.broadcast %100 : vector<8x1xf32> to vector<8x32xf32>
    %102 = arith.subf %96, %101 : vector<8x32xf32>
    %103 = arith.mulf %102, %102 : vector<8x32xf32>
    %cst_63 = arith.constant dense<0.000000e+00> : vector<8xf32>
    %104 = vector.multi_reduction <add>, %103, %cst_63 [1] : vector<8x32xf32> to vector<8xf32>
    %105 = vector.shape_cast %104 : vector<8xf32> to vector<8x1xf32>
    %cst_64 = arith.constant 3.200000e+01 : f32
    %106 = vector.broadcast %cst_64 : f32 to vector<8x1xf32>
    %107 = arith.divf %105, %106 : vector<8x1xf32>
    %108 = vector.broadcast %100 : vector<8x1xf32> to vector<8x32xf32>
    %109 = arith.subf %96, %108 : vector<8x32xf32>
    %cst_65 = arith.constant 9.99999974E-6 : f32
    %110 = vector.broadcast %cst_65 : f32 to vector<8x1xf32>
    %111 = arith.addf %107, %110 : vector<8x1xf32>
    %112 = math.rsqrt %111 : vector<8x1xf32>
    %113 = vector.broadcast %112 : vector<8x1xf32> to vector<8x32xf32>
    %114 = arith.mulf %109, %113 : vector<8x32xf32>
    %c0_66 = arith.constant 0 : index
    %c0_67 = arith.constant 0 : index
    %115 = vector.load %arg16[%c0_66, %c0_67] : memref<1x32xf32, #tpu.memory_space<vmem>>, vector<1x32xf32>
    %116 = vector.broadcast %115 : vector<1x32xf32> to vector<8x32xf32>
    %117 = arith.mulf %114, %116 : vector<8x32xf32>
    %c0_68 = arith.constant 0 : index
    %c0_69 = arith.constant 0 : index
    %118 = vector.load %arg17[%c0_68, %c0_69] : memref<1x32xf32, #tpu.memory_space<vmem>>, vector<1x32xf32>
    %119 = vector.broadcast %118 : vector<1x32xf32> to vector<8x32xf32>
    %120 = arith.addf %117, %119 : vector<8x32xf32>
    %c0_70 = arith.constant 0 : index
    %c0_71 = arith.constant 0 : index
    %c0_72 = arith.constant 0 : index
    %121 = vector.load %arg18[%c0_70, %c0_71, %c0_72] : memref<1x8x32xf32, #tpu.memory_space<vmem>>, vector<1x8x32xf32>
    %122 = vector.shape_cast %121 : vector<1x8x32xf32> to vector<8x32xf32>
    %123 = vector.shape_cast %120 : vector<8x32xf32> to vector<1x8x32xf32>
    tpu.vector_store %arg18[%c0_70, %c0_71, %c0_72], %123 {strides = array<i32>} : memref<1x8x32xf32, #tpu.memory_space<vmem>>, vector<1x8x32xf32>,
    return
  }
  func.func @transform_0(%arg0: i32) -> (i32, i32, i32) {
    %c0_i32 = arith.constant 0 : i32
    %c0_i32_0 = arith.constant 0 : i32
    %c0_i32_1 = arith.constant 0 : i32
    return %arg0, %c0_i32, %c0_i32_0 : i32, i32, i32
  }
  func.func @transform_1(%arg0: i32) -> (i32, i32, i32) {
    %c0_i32 = arith.constant 0 : i32
    %c0_i32_0 = arith.constant 0 : i32
    %c0_i32_1 = arith.constant 0 : i32
    %c0_i32_2 = arith.constant 0 : i32
    return %c0_i32, %c0_i32_0, %c0_i32_1 : i32, i32, i32
  }
  func.func @transform_2(%arg0: i32) -> (i32, i32, i32) {
    %c0_i32 = arith.constant 0 : i32
    %c0_i32_0 = arith.constant 0 : i32
    %c0_i32_1 = arith.constant 0 : i32
    %c0_i32_2 = arith.constant 0 : i32
    return %c0_i32, %c0_i32_0, %c0_i32_1 : i32, i32, i32
  }
  func.func @transform_3(%arg0: i32) -> (i32, i32, i32) {
    %c0_i32 = arith.constant 0 : i32
    %c0_i32_0 = arith.constant 0 : i32
    %c0_i32_1 = arith.constant 0 : i32
    %c0_i32_2 = arith.constant 0 : i32
    return %c0_i32, %c0_i32_0, %c0_i32_1 : i32, i32, i32
  }
  func.func @transform_4(%arg0: i32) -> (i32, i32, i32) {
    %c0_i32 = arith.constant 0 : i32
    %c0_i32_0 = arith.constant 0 : i32
    %c0_i32_1 = arith.constant 0 : i32
    %c0_i32_2 = arith.constant 0 : i32
    return %c0_i32, %c0_i32_0, %c0_i32_1 : i32, i32, i32
  }
  func.func @transform_5(%arg0: i32) -> (i32, i32, i32) {
    %c0_i32 = arith.constant 0 : i32
    %c0_i32_0 = arith.constant 0 : i32
    %c0_i32_1 = arith.constant 0 : i32
    %c0_i32_2 = arith.constant 0 : i32
    return %c0_i32, %c0_i32_0, %c0_i32_1 : i32, i32, i32
  }
  func.func @transform_6(%arg0: i32) -> (i32, i32, i32) {
    %c0_i32 = arith.constant 0 : i32
    %c0_i32_0 = arith.constant 0 : i32
    %c0_i32_1 = arith.constant 0 : i32
    %c0_i32_2 = arith.constant 0 : i32
    return %c0_i32, %c0_i32_0, %c0_i32_1 : i32, i32, i32
  }
  func.func @transform_7(%arg0: i32) -> (i32, i32, i32) {
    %c0_i32 = arith.constant 0 : i32
    %c0_i32_0 = arith.constant 0 : i32
    %c0_i32_1 = arith.constant 0 : i32
    %c0_i32_2 = arith.constant 0 : i32
    return %c0_i32, %c0_i32_0, %c0_i32_1 : i32, i32, i32
  }
  func.func @transform_8(%arg0: i32) -> (i32, i32) {
    %c0_i32 = arith.constant 0 : i32
    %c0_i32_0 = arith.constant 0 : i32
    %c0_i32_1 = arith.constant 0 : i32
    return %c0_i32, %c0_i32_0 : i32, i32
  }
  func.func @transform_9(%arg0: i32) -> (i32, i32) {
    %c0_i32 = arith.constant 0 : i32
    %c0_i32_0 = arith.constant 0 : i32
    %c0_i32_1 = arith.constant 0 : i32
    return %c0_i32, %c0_i32_0 : i32, i32
  }
  func.func @transform_10(%arg0: i32) -> (i32, i32) {
    %c0_i32 = arith.constant 0 : i32
    %c0_i32_0 = arith.constant 0 : i32
    %c0_i32_1 = arith.constant 0 : i32
    return %c0_i32, %c0_i32_0 : i32, i32
  }
  func.func @transform_11(%arg0: i32) -> (i32, i32) {
    %c0_i32 = arith.constant 0 : i32
    %c0_i32_0 = arith.constant 0 : i32
    %c0_i32_1 = arith.constant 0 : i32
    return %c0_i32, %c0_i32_0 : i32, i32
  }
  func.func @transform_12(%arg0: i32) -> (i32, i32) {
    %c0_i32 = arith.constant 0 : i32
    %c0_i32_0 = arith.constant 0 : i32
    %c0_i32_1 = arith.constant 0 : i32
    return %c0_i32, %c0_i32_0 : i32, i32
  }
  func.func @transform_13(%arg0: i32) -> (i32, i32) {
    %c0_i32 = arith.constant 0 : i32
    %c0_i32_0 = arith.constant 0 : i32
    %c0_i32_1 = arith.constant 0 : i32
    return %c0_i32, %c0_i32_0 : i32, i32
  }
  func.func @transform_14(%arg0: i32) -> (i32, i32) {
    %c0_i32 = arith.constant 0 : i32
    %c0_i32_0 = arith.constant 0 : i32
    %c0_i32_1 = arith.constant 0 : i32
    return %c0_i32, %c0_i32_0 : i32, i32
  }
  func.func @transform_15(%arg0: i32) -> (i32, i32) {
    %c0_i32 = arith.constant 0 : i32
    %c0_i32_0 = arith.constant 0 : i32
    %c0_i32_1 = arith.constant 0 : i32
    return %c0_i32, %c0_i32_0 : i32, i32
  }
  func.func @transform_16(%arg0: i32) -> (i32, i32) {
    %c0_i32 = arith.constant 0 : i32
    %c0_i32_0 = arith.constant 0 : i32
    %c0_i32_1 = arith.constant 0 : i32
    return %c0_i32, %c0_i32_0 : i32, i32
  }
  func.func @transform_17(%arg0: i32) -> (i32, i32, i32) {
    %c0_i32 = arith.constant 0 : i32
    %c0_i32_0 = arith.constant 0 : i32
    %c0_i32_1 = arith.constant 0 : i32
    return %arg0, %c0_i32, %c0_i32_0 : i32, i32, i32
  }
  func.func @transform_18(%arg0: i32) -> (i32, i32, i32, i32) {
    %c0_i32 = arith.constant 0 : i32
    %c0_i32_0 = arith.constant 0 : i32
    %c0_i32_1 = arith.constant 0 : i32
    %c0_i32_2 = arith.constant 0 : i32
    return %arg0, %c0_i32, %c0_i32_0, %c0_i32_1 : i32, i32, i32, i32
  }
}

</mosaic_0001>

<llo_original>
// kernel: tpu_custom_call.1
$region0: #{tpu_custom_call.1}
  #allocation0 [shape = 'u32[]', space=smem, size = 0x4, offset = 0x4, fixed_abs, tag = 'smem constant byte address 0x4 - core index']
  #allocation1 [shape = 'u32[144,128]{1,0:T(1,128)}', space=vmem, size = 0x12000, scoped, tag = 'internal scratch']
  %s0 = inlined_call_operand.vmem [shape: f32[2,8,32], index: 0, kind: input, shape index: {}]
  %s1 = inlined_call_operand.vmem [shape: bf16[4,32,8], index: 1, kind: input, shape index: {}]
  %s2 = inlined_call_operand.vmem [shape: bf16[4,32,8], index: 2, kind: input, shape index: {}]
  %s3 = inlined_call_operand.vmem [shape: bf16[4,32,8], index: 3, kind: input, shape index: {}]
  %s4 = inlined_call_operand.vmem [shape: f32[4,1,8], index: 4, kind: input, shape index: {}]
  %s5 = inlined_call_operand.vmem [shape: f32[4,1,8], index: 5, kind: input, shape index: {}]
  %s6 = inlined_call_operand.vmem [shape: f32[4,1,8], index: 6, kind: input, shape index: {}]
  %s7 = inlined_call_operand.vmem [shape: bf16[4,8,32], index: 7, kind: input, shape index: {}]
  %s8 = inlined_call_operand.vmem [shape: f32[1,32], index: 8, kind: input, shape index: {}]
  %s9 = inlined_call_operand.vmem [shape: f32[1,32], index: 9, kind: input, shape index: {}]
  %s10 = inlined_call_operand.vmem [shape: f32[1,32], index: 10, kind: input, shape index: {}]
  %s11 = inlined_call_operand.vmem [shape: bf16[32,128], index: 11, kind: input, shape index: {}]
  %s12 = inlined_call_operand.vmem [shape: f32[1,128], index: 12, kind: input, shape index: {}]
  %s13 = inlined_call_operand.vmem [shape: bf16[128,32], index: 13, kind: input, shape index: {}]
  %s14 = inlined_call_operand.vmem [shape: f32[1,32], index: 14, kind: input, shape index: {}]
  %s15 = inlined_call_operand.vmem [shape: f32[1,32], index: 15, kind: input, shape index: {}]
  %s16 = inlined_call_operand.vmem [shape: f32[1,32], index: 16, kind: input, shape index: {}]
  %s17 = inlined_call_operand.hbm [shape: f32[2,8,32], index: 17, kind: output, shape index: {0}]
  %s18 = inlined_call_operand.hbm [shape: f32[2,4,8,8], index: 18, kind: output, shape index: {1}]
  %19 = xla_tuple %s17, %s18
  %s20 = sld [smem:[#allocation0]]
  $region109: #{tpu_custom_call.1} parent=0
    _
  %s22 = ssub.s32 1, %s20
  %s23 = scalar_select 0, %s22, %s20
  $region1: #{tpu_custom_call.1} parent=0
    #allocation2 [shape = 'u8[8192]{0}', space=vmem, size = 0x2000, scoped, tag = 'output window, operand 0']
    #allocation3 [shape = 's32[2]{0}', space=sflag, size = 0x8, scoped, tag = 'scoped memory for tpu_custom_call.1']
    #allocation4 [shape = 'u8[32768]{0}', space=vmem, size = 0x8000, scoped, tag = 'output window, operand 1']
    #allocation5 [shape = 's32[2]{0}', space=sflag, size = 0x8, scoped, tag = 'scoped memory for tpu_custom_call.1']
    %24 = vsyncpa [#allocation3], 0
    %s25 = scalar_lea.sflag [#allocation3], 1
    %26 = vsyncpa %s25, 0
    %27 = vsyncpa [#allocation5], 0
    %s28 = scalar_lea.sflag [#allocation5], 1
    %29 = vsyncpa %s28, 0
    loop: start=0, step=1, limit=4
    $region2: #{tpu_custom_call.1} parent=1 // loop_pre_header
      _
    $region3: #{tpu_custom_call.1} parent=1 // loop_header
      %s31 = sphi 0, %s35
      %p32 = scmp.ge.s32.totalorder %s31, 4
      %s41 = sphi 0, %s43
      %s44 = sphi 0, %s41
      %s45 = sphi 0, %s44
      %s61 = sphi 0, %s45
      %s65 = sphi 0, %s65
      %s67 = sphi 0, %s65
      %s68 = sphi 0, %s67
      %s82 = sphi 0, %s68
      %s86 = sphi 0, %s86
      %s88 = sphi 0, %s86
      %s89 = sphi 0, %s88
      %s103 = sphi 0, %s89
      %s107 = sphi 0, %s107
      %s109 = sphi 0, %s107
      %s110 = sphi 0, %s109
      %s124 = sphi 0, %s110
      %s128 = sphi 0, %s128
      %s130 = sphi 0, %s128
      %s131 = sphi 0, %s130
      %s145 = sphi 0, %s131
      %s149 = sphi 0, %s149
      %s151 = sphi 0, %s149
      %s152 = sphi 0, %s151
      %s166 = sphi 0, %s152
      %s170 = sphi 0, %s170
      %s172 = sphi 0, %s170
      %s173 = sphi 0, %s172
      %s187 = sphi 0, %s173
      %s191 = sphi 0, %s191
      %s193 = sphi 0, %s191
      %s194 = sphi 0, %s193
      %s208 = sphi 0, %s194
      %s212 = sphi 0, %s212
      %s214 = sphi 0, %s212
      %s215 = sphi 0, %s214
      %s229 = sphi 0, %s215
      %s233 = sphi 0, %s233
      %s235 = sphi 0, %s233
      %s236 = sphi 0, %s235
      %s250 = sphi 0, %s236
      %s254 = sphi 0, %s254
      %s256 = sphi 0, %s254
      %s257 = sphi 0, %s256
      %s271 = sphi 0, %s257
      %s275 = sphi 0, %s275
      %s277 = sphi 0, %s275
      %s278 = sphi 0, %s277
      %s292 = sphi 0, %s278
      %s296 = sphi 0, %s296
      %s298 = sphi 0, %s296
      %s299 = sphi 0, %s298
      %s313 = sphi 0, %s299
      %s317 = sphi 0, %s317
      %s319 = sphi 0, %s317
      %s320 = sphi 0, %s319
      %s334 = sphi 0, %s320
      %s338 = sphi 0, %s338
      %s340 = sphi 0, %s338
      %s341 = sphi 0, %s340
      %s355 = sphi 0, %s341
      %s359 = sphi 0, %s359
      %s361 = sphi 0, %s359
      %s362 = sphi 0, %s361
      %s376 = sphi 0, %s362
      %s380 = sphi 0, %s380
      %s382 = sphi 0, %s380
      %s383 = sphi 0, %s382
      %s397 = sphi 0, %s383
      %s403 = sphi 0, %s405
      %s406 = sphi 0, %s403
      %s407 = sphi 0, %s406
      %s423 = sphi 0, %s407
      %s429 = sphi 0, %s431
      %s432 = sphi 0, %s429
      %s433 = sphi 0, %s432
      %s449 = sphi 0, %s433
    $region4: #{tpu_custom_call.1} parent=1 // loop_header_branch
      %34 = sbr.rel (%p32) target = $region8
    $region5: #{tpu_custom_call.1} parent=1 // loop_body
      %s36 = ssub.s32 %s31, 1
      %s37 = ssub.s32 %s31, 2
      %s38 = sadd.s32 %s31, 1
      %s39 = ssub.s32 %s31, %s38
      %p40 = scmp.eq.s32.totalorder %s39, 0
      %s42 = sadd.s32 %s41, 1
      %s43 = scalar_select %p40, %s41, %s42
      %p46 = pneg %p40
      %p47 = scmp.eq.s32.totalorder %s31, 1
      %p48 = por %p46, %p47
      %p49 = scmp.ne.s32.totalorder %s41, %s44
      %p50 = scmp.eq.s32.totalorder %s31, 0
      %p51 = por %p49, %p50
      %p52 = scmp.ne.s32.totalorder %s41, %s44
      %p53 = scmp.eq.s32.totalorder %s36, 1
      %p54 = por %p52, %p53
      %p55 = scmp.ne.s32.totalorder %s44, %s45
      %p56 = scmp.eq.s32.totalorder %s36, 0
      %p57 = por %p55, %p56
      %p58 = scmp.ne.s32.totalorder %s44, %s45
      %p59 = scmp.eq.s32.totalorder %s37, 1
      %p60 = por %p58, %p59
      %p62 = scmp.ne.s32.totalorder %s45, %s61
      %p63 = scmp.eq.s32.totalorder %s37, 0
      %p64 = por %p62, %p63
      %s66 = sadd.s32 %s65, 1
      %p69 = scmp.eq.s32.totalorder %s31, 1
      %p70 = scmp.ne.s32.totalorder %s65, %s67
      %p71 = scmp.eq.s32.totalorder %s31, 0
      %p72 = por %p70, %p71
      %p73 = scmp.ne.s32.totalorder %s65, %s67
      %p74 = scmp.eq.s32.totalorder %s36, 1
      %p75 = por %p73, %p74
      %p76 = scmp.ne.s32.totalorder %s67, %s68
      %p77 = scmp.eq.s32.totalorder %s36, 0
      %p78 = por %p76, %p77
      %p79 = scmp.ne.s32.totalorder %s67, %s68
      %p80 = scmp.eq.s32.totalorder %s37, 1
      %p81 = por %p79, %p80
      %p83 = scmp.ne.s32.totalorder %s68, %s82
      %p84 = scmp.eq.s32.totalorder %s37, 0
      %p85 = por %p83, %p84
      %s87 = sadd.s32 %s86, 1
      %p90 = scmp.eq.s32.totalorder %s31, 1
      %p91 = scmp.ne.s32.totalorder %s86, %s88
      %p92 = scmp.eq.s32.totalorder %s31, 0
      %p93 = por %p91, %p92
      %p94 = scmp.ne.s32.totalorder %s86, %s88
      %p95 = scmp.eq.s32.totalorder %s36, 1
      %p96 = por %p94, %p95
      %p97 = scmp.ne.s32.totalorder %s88, %s89
      %p98 = scmp.eq.s32.totalorder %s36, 0
      %p99 = por %p97, %p98
      %p100 = scmp.ne.s32.totalorder %s88, %s89
      %p101 = scmp.eq.s32.totalorder %s37, 1
      %p102 = por %p100, %p101
      %p104 = scmp.ne.s32.totalorder %s89, %s103
      %p105 = scmp.eq.s32.totalorder %s37, 0
      %p106 = por %p104, %p105
      %s108 = sadd.s32 %s107, 1
      %p111 = scmp.eq.s32.totalorder %s31, 1
      %p112 = scmp.ne.s32.totalorder %s107, %s109
      %p113 = scmp.eq.s32.totalorder %s31, 0
      %p114 = por %p112, %p113
      %p115 = scmp.ne.s32.totalorder %s107, %s109
      %p116 = scmp.eq.s32.totalorder %s36, 1
      %p117 = por %p115, %p116
      %p118 = scmp.ne.s32.totalorder %s109, %s110
      %p119 = scmp.eq.s32.totalorder %s36, 0
      %p120 = por %p118, %p119
      %p121 = scmp.ne.s32.totalorder %s109, %s110
      %p122 = scmp.eq.s32.totalorder %s37, 1
      %p123 = por %p121, %p122
      %p125 = scmp.ne.s32.totalorder %s110, %s124
      %p126 = scmp.eq.s32.totalorder %s37, 0
      %p127 = por %p125, %p126
      %s129 = sadd.s32 %s128, 1
      %p132 = scmp.eq.s32.totalorder %s31, 1
      %p133 = scmp.ne.s32.totalorder %s128, %s130
      %p134 = scmp.eq.s32.totalorder %s31, 0
      %p135 = por %p133, %p134
      %p136 = scmp.ne.s32.totalorder %s128, %s130
      %p137 = scmp.eq.s32.totalorder %s36, 1
      %p138 = por %p136, %p137
      %p139 = scmp.ne.s32.totalorder %s130, %s131
      %p140 = scmp.eq.s32.totalorder %s36, 0
      %p141 = por %p139, %p140
      %p142 = scmp.ne.s32.totalorder %s130, %s131
      %p143 = scmp.eq.s32.totalorder %s37, 1
      %p144 = por %p142, %p143
      %p146 = scmp.ne.s32.totalorder %s131, %s145
      %p147 = scmp.eq.s32.totalorder %s37, 0
      %p148 = por %p146, %p147
      %s150 = sadd.s32 %s149, 1
      %p153 = scmp.eq.s32.totalorder %s31, 1
      %p154 = scmp.ne.s32.totalorder %s149, %s151
      %p155 = scmp.eq.s32.totalorder %s31, 0
      %p156 = por %p154, %p155
      %p157 = scmp.ne.s32.totalorder %s149, %s151
      %p158 = scmp.eq.s32.totalorder %s36, 1
      %p159 = por %p157, %p158
      %p160 = scmp.ne.s32.totalorder %s151, %s152
      %p161 = scmp.eq.s32.totalorder %s36, 0
      %p162 = por %p160, %p161
      %p163 = scmp.ne.s32.totalorder %s151, %s152
      %p164 = scmp.eq.s32.totalorder %s37, 1
      %p165 = por %p163, %p164
      %p167 = scmp.ne.s32.totalorder %s152, %s166
      %p168 = scmp.eq.s32.totalorder %s37, 0
      %p169 = por %p167, %p168
      %s171 = sadd.s32 %s170, 1
      %p174 = scmp.eq.s32.totalorder %s31, 1
      %p175 = scmp.ne.s32.totalorder %s170, %s172
      %p176 = scmp.eq.s32.totalorder %s31, 0
      %p177 = por %p175, %p176
      %p178 = scmp.ne.s32.totalorder %s170, %s172
      %p179 = scmp.eq.s32.totalorder %s36, 1
      %p180 = por %p178, %p179
      %p181 = scmp.ne.s32.totalorder %s172, %s173
      %p182 = scmp.eq.s32.totalorder %s36, 0
      %p183 = por %p181, %p182
      %p184 = scmp.ne.s32.totalorder %s172, %s173
      %p185 = scmp.eq.s32.totalorder %s37, 1
      %p186 = por %p184, %p185
      %p188 = scmp.ne.s32.totalorder %s173, %s187
      %p189 = scmp.eq.s32.totalorder %s37, 0
      %p190 = por %p188, %p189
      %s192 = sadd.s32 %s191, 1
      %p195 = scmp.eq.s32.totalorder %s31, 1
      %p196 = scmp.ne.s32.totalorder %s191, %s193
      %p197 = scmp.eq.s32.totalorder %s31, 0
      %p198 = por %p196, %p197
      %p199 = scmp.ne.s32.totalorder %s191, %s193
      %p200 = scmp.eq.s32.totalorder %s36, 1
      %p201 = por %p199, %p200
      %p202 = scmp.ne.s32.totalorder %s193, %s194
      %p203 = scmp.eq.s32.totalorder %s36, 0
      %p204 = por %p202, %p203
      %p205 = scmp.ne.s32.totalorder %s193, %s194
      %p206 = scmp.eq.s32.totalorder %s37, 1
      %p207 = por %p205, %p206
      %p209 = scmp.ne.s32.totalorder %s194, %s208
      %p210 = scmp.eq.s32.totalorder %s37, 0
      %p211 = por %p209, %p210
      %s213 = sadd.s32 %s212, 1
      %p216 = scmp.eq.s32.totalorder %s31, 1
      %p217 = scmp.ne.s32.totalorder %s212, %s214
      %p218 = scmp.eq.s32.totalorder %s31, 0
      %p219 = por %p217, %p218
      %p220 = scmp.ne.s32.totalorder %s212, %s214
      %p221 = scmp.eq.s32.totalorder %s36, 1
      %p222 = por %p220, %p221
      %p223 = scmp.ne.s32.totalorder %s214, %s215
      %p224 = scmp.eq.s32.totalorder %s36, 0
      %p225 = por %p223, %p224
      %p226 = scmp.ne.s32.totalorder %s214, %s215
      %p227 = scmp.eq.s32.totalorder %s37, 1
      %p228 = por %p226, %p227
      %p230 = scmp.ne.s32.totalorder %s215, %s229
      %p231 = scmp.eq.s32.totalorder %s37, 0
      %p232 = por %p230, %p231
      %s234 = sadd.s32 %s233, 1
      %p237 = scmp.eq.s32.totalorder %s31, 1
      %p238 = scmp.ne.s32.totalorder %s233, %s235
      %p239 = scmp.eq.s32.totalorder %s31, 0
      %p240 = por %p238, %p239
      %p241 = scmp.ne.s32.totalorder %s233, %s235
      %p242 = scmp.eq.s32.totalorder %s36, 1
      %p243 = por %p241, %p242
      %p244 = scmp.ne.s32.totalorder %s235, %s236
      %p245 = scmp.eq.s32.totalorder %s36, 0
      %p246 = por %p244, %p245
      %p247 = scmp.ne.s32.totalorder %s235, %s236
      %p248 = scmp.eq.s32.totalorder %s37, 1
      %p249 = por %p247, %p248
      %p251 = scmp.ne.s32.totalorder %s236, %s250
      %p252 = scmp.eq.s32.totalorder %s37, 0
      %p253 = por %p251, %p252
      %s255 = sadd.s32 %s254, 1
      %p258 = scmp.eq.s32.totalorder %s31, 1
      %p259 = scmp.ne.s32.totalorder %s254, %s256
      %p260 = scmp.eq.s32.totalorder %s31, 0
      %p261 = por %p259, %p260
      %p262 = scmp.ne.s32.totalorder %s254, %s256
      %p263 = scmp.eq.s32.totalorder %s36, 1
      %p264 = por %p262, %p263
      %p265 = scmp.ne.s32.totalorder %s256, %s257
      %p266 = scmp.eq.s32.totalorder %s36, 0
      %p267 = por %p265, %p266
      %p268 = scmp.ne.s32.totalorder %s256, %s257
      %p269 = scmp.eq.s32.totalorder %s37, 1
      %p270 = por %p268, %p269
      %p272 = scmp.ne.s32.totalorder %s257, %s271
      %p273 = scmp.eq.s32.totalorder %s37, 0
      %p274 = por %p272, %p273
      %s276 = sadd.s32 %s275, 1
      %p279 = scmp.eq.s32.totalorder %s31, 1
      %p280 = scmp.ne.s32.totalorder %s275, %s277
      %p281 = scmp.eq.s32.totalorder %s31, 0
      %p282 = por %p280, %p281
      %p283 = scmp.ne.s32.totalorder %s275, %s277
      %p284 = scmp.eq.s32.totalorder %s36, 1
      %p285 = por %p283, %p284
      %p286 = scmp.ne.s32.totalorder %s277, %s278
      %p287 = scmp.eq.s32.totalorder %s36, 0
      %p288 = por %p286, %p287
      %p289 = scmp.ne.s32.totalorder %s277, %s278
      %p290 = scmp.eq.s32.totalorder %s37, 1
      %p291 = por %p289, %p290
      %p293 = scmp.ne.s32.totalorder %s278, %s292
      %p294 = scmp.eq.s32.totalorder %s37, 0
      %p295 = por %p293, %p294
      %s297 = sadd.s32 %s296, 1
      %p300 = scmp.eq.s32.totalorder %s31, 1
      %p301 = scmp.ne.s32.totalorder %s296, %s298
      %p302 = scmp.eq.s32.totalorder %s31, 0
      %p303 = por %p301, %p302
      %p304 = scmp.ne.s32.totalorder %s296, %s298
      %p305 = scmp.eq.s32.totalorder %s36, 1
      %p306 = por %p304, %p305
      %p307 = scmp.ne.s32.totalorder %s298, %s299
      %p308 = scmp.eq.s32.totalorder %s36, 0
      %p309 = por %p307, %p308
      %p310 = scmp.ne.s32.totalorder %s298, %s299
      %p311 = scmp.eq.s32.totalorder %s37, 1
      %p312 = por %p310, %p311
      %p314 = scmp.ne.s32.totalorder %s299, %s313
      %p315 = scmp.eq.s32.totalorder %s37, 0
      %p316 = por %p314, %p315
      %s318 = sadd.s32 %s317, 1
      %p321 = scmp.eq.s32.totalorder %s31, 1
      %p322 = scmp.ne.s32.totalorder %s317, %s319
      %p323 = scmp.eq.s32.totalorder %s31, 0
      %p324 = por %p322, %p323
      %p325 = scmp.ne.s32.totalorder %s317, %s319
      %p326 = scmp.eq.s32.totalorder %s36, 1
      %p327 = por %p325, %p326
      %p328 = scmp.ne.s32.totalorder %s319, %s320
      %p329 = scmp.eq.s32.totalorder %s36, 0
      %p330 = por %p328, %p329
      %p331 = scmp.ne.s32.totalorder %s319, %s320
      %p332 = scmp.eq.s32.totalorder %s37, 1
      %p333 = por %p331, %p332
      %p335 = scmp.ne.s32.totalorder %s320, %s334
      %p336 = scmp.eq.s32.totalorder %s37, 0
      %p337 = por %p335, %p336
      %s339 = sadd.s32 %s338, 1
      %p342 = scmp.eq.s32.totalorder %s31, 1
      %p343 = scmp.ne.s32.totalorder %s338, %s340
      %p344 = scmp.eq.s32.totalorder %s31, 0
      %p345 = por %p343, %p344
      %p346 = scmp.ne.s32.totalorder %s338, %s340
      %p347 = scmp.eq.s32.totalorder %s36, 1
      %p348 = por %p346, %p347
      %p349 = scmp.ne.s32.totalorder %s340, %s341
      %p350 = scmp.eq.s32.totalorder %s36, 0
      %p351 = por %p349, %p350
      %p352 = scmp.ne.s32.totalorder %s340, %s341
      %p353 = scmp.eq.s32.totalorder %s37, 1
      %p354 = por %p352, %p353
      %p356 = scmp.ne.s32.totalorder %s341, %s355
      %p357 = scmp.eq.s32.totalorder %s37, 0
      %p358 = por %p356, %p357
      %s360 = sadd.s32 %s359, 1
      %p363 = scmp.eq.s32.totalorder %s31, 1
      %p364 = scmp.ne.s32.totalorder %s359, %s361
      %p365 = scmp.eq.s32.totalorder %s31, 0
      %p366 = por %p364, %p365
      %p367 = scmp.ne.s32.totalorder %s359, %s361
      %p368 = scmp.eq.s32.totalorder %s36, 1
      %p369 = por %p367, %p368
      %p370 = scmp.ne.s32.totalorder %s361, %s362
      %p371 = scmp.eq.s32.totalorder %s36, 0
      %p372 = por %p370, %p371
      %p373 = scmp.ne.s32.totalorder %s361, %s362
      %p374 = scmp.eq.s32.totalorder %s37, 1
      %p375 = por %p373, %p374
      %p377 = scmp.ne.s32.totalorder %s362, %s376
      %p378 = scmp.eq.s32.totalorder %s37, 0
      %p379 = por %p377, %p378
      %s381 = sadd.s32 %s380, 1
      %p384 = scmp.eq.s32.totalorder %s31, 1
      %p385 = scmp.ne.s32.totalorder %s380, %s382
      %p386 = scmp.eq.s32.totalorder %s31, 0
      %p387 = por %p385, %p386
      %p388 = scmp.ne.s32.totalorder %s380, %s382
      %p389 = scmp.eq.s32.totalorder %s36, 1
      %p390 = por %p388, %p389
      %p391 = scmp.ne.s32.totalorder %s382, %s383
      %p392 = scmp.eq.s32.totalorder %s36, 0
      %p393 = por %p391, %p392
      %p394 = scmp.ne.s32.totalorder %s382, %s383
      %p395 = scmp.eq.s32.totalorder %s37, 1
      %p396 = por %p394, %p395
      %p398 = scmp.ne.s32.totalorder %s383, %s397
      %p399 = scmp.eq.s32.totalorder %s37, 0
      %p400 = por %p398, %p399
      %s401 = ssub.s32 %s31, %s38
      %p402 = scmp.eq.s32.totalorder %s401, 0
      %s404 = sadd.s32 %s403, 1
      %s405 = scalar_select %p402, %s403, %s404
      %p408 = pneg %p402
      %p409 = scmp.eq.s32.totalorder %s31, 1
      %p410 = por %p408, %p409
      %p411 = scmp.ne.s32.totalorder %s403, %s406
      %p412 = scmp.eq.s32.totalorder %s31, 0
      %p413 = por %p411, %p412
      %p414 = scmp.ne.s32.totalorder %s403, %s406
      %p415 = scmp.eq.s32.totalorder %s36, 1
      %p416 = por %p414, %p415
      %p417 = scmp.ne.s32.totalorder %s406, %s407
      %p418 = scmp.eq.s32.totalorder %s36, 0
      %p419 = por %p417, %p418
      %p420 = scmp.ne.s32.totalorder %s406, %s407
      %p421 = scmp.eq.s32.totalorder %s37, 1
      %p422 = por %p420, %p421
      %p424 = scmp.ne.s32.totalorder %s407, %s423
      %p425 = scmp.eq.s32.totalorder %s37, 0
      %p426 = por %p424, %p425
      %s427 = ssub.s32 %s31, %s38
      %p428 = scmp.eq.s32.totalorder %s427, 0
      %s430 = sadd.s32 %s429, 1
      %s431 = scalar_select %p428, %s429, %s430
      %p434 = pneg %p428
      %p435 = scmp.eq.s32.totalorder %s31, 1
      %p436 = por %p434, %p435
      %p437 = scmp.ne.s32.totalorder %s429, %s432
      %p438 = scmp.eq.s32.totalorder %s31, 0
      %p439 = por %p437, %p438
      %p440 = scmp.ne.s32.totalorder %s429, %s432
      %p441 = scmp.eq.s32.totalorder %s36, 1
      %p442 = por %p440, %p441
      %p443 = scmp.ne.s32.totalorder %s432, %s433
      %p444 = scmp.eq.s32.totalorder %s36, 0
      %p445 = por %p443, %p444
      %p446 = scmp.ne.s32.totalorder %s432, %s433
      %p447 = scmp.eq.s32.totalorder %s37, 1
      %p448 = por %p446, %p447
      %p450 = scmp.ne.s32.totalorder %s433, %s449
      %p451 = scmp.eq.s32.totalorder %s37, 0
      %p452 = por %p450, %p451
      %p453 = scmp.le.s32.totalorder 1, %s31
      %p454 = scmp.lt.s32.totalorder %s31, 3
      %p455 = pnand %p453, %p454
      %p456 = pneg %p455
      // Predicated region
      $region9: #{tpu_custom_call.1} parent=5 // pred_check
        _
      $region10: #{tpu_custom_call.1} parent=5 // pred_check_branch
        %458 = sbr.rel (%p455) target = $region12
      $region11: #{tpu_custom_call.1} parent=5 // pred_region
        %s459 = ssub.s32 %s31, 1
        // Predicated region
        $region13: #{tpu_custom_call.1} parent=11 // pred_check
          %p460 = pneg %p78
        $region14: #{tpu_custom_call.1} parent=11 // pred_check_branch
          %462 = sbr.rel (%p460) target = $region16
        $region15: #{tpu_custom_call.1} parent=11 // pred_region
          _
        $region16: #{tpu_custom_call.1} parent=11 // pred_fallthru
          _
        // Predicated region
        $region17: #{tpu_custom_call.1} parent=11 // pred_check
          %p463 = pneg %p99
        $region18: #{tpu_custom_call.1} parent=11 // pred_check_branch
          %465 = sbr.rel (%p463) target = $region20
        $region19: #{tpu_custom_call.1} parent=11 // pred_region
          _
        $region20: #{tpu_custom_call.1} parent=11 // pred_fallthru
          _
        // Predicated region
        $region21: #{tpu_custom_call.1} parent=11 // pred_check
          %p466 = pneg %p120
        $region22: #{tpu_custom_call.1} parent=11 // pred_check_branch
          %468 = sbr.rel (%p466) target = $region24
        $region23: #{tpu_custom_call.1} parent=11 // pred_region
          _
        $region24: #{tpu_custom_call.1} parent=11 // pred_fallthru
          _
        // Predicated region
        $region25: #{tpu_custom_call.1} parent=11 // pred_check
          %p469 = pneg %p141
        $region26: #{tpu_custom_call.1} parent=11 // pred_check_branch
          %471 = sbr.rel (%p469) target = $region28
        $region27: #{tpu_custom_call.1} parent=11 // pred_region
          _
        $region28: #{tpu_custom_call.1} parent=11 // pred_fallthru
          _
        // Predicated region
        $region29: #{tpu_custom_call.1} parent=11 // pred_check
          %p472 = pneg %p162
        $region30: #{tpu_custom_call.1} parent=11 // pred_check_branch
          %474 = sbr.rel (%p472) target = $region32
        $region31: #{tpu_custom_call.1} parent=11 // pred_region
          _
        $region32: #{tpu_custom_call.1} parent=11 // pred_fallthru
          _
        // Predicated region
        $region33: #{tpu_custom_call.1} parent=11 // pred_check
          %p475 = pneg %p183
        $region34: #{tpu_custom_call.1} parent=11 // pred_check_branch
          %477 = sbr.rel (%p475) target = $region36
        $region35: #{tpu_custom_call.1} parent=11 // pred_region
          _
        $region36: #{tpu_custom_call.1} parent=11 // pred_fallthru
          _
        // Predicated region
        $region37: #{tpu_custom_call.1} parent=11 // pred_check
          %p478 = pneg %p204
        $region38: #{tpu_custom_call.1} parent=11 // pred_check_branch
          %480 = sbr.rel (%p478) target = $region40
        $region39: #{tpu_custom_call.1} parent=11 // pred_region
          _
        $region40: #{tpu_custom_call.1} parent=11 // pred_fallthru
          _
        // Predicated region
        $region41: #{tpu_custom_call.1} parent=11 // pred_check
          %p481 = pneg %p225
        $region42: #{tpu_custom_call.1} parent=11 // pred_check_branch
          %483 = sbr.rel (%p481) target = $region44
        $region43: #{tpu_custom_call.1} parent=11 // pred_region
          _
        $region44: #{tpu_custom_call.1} parent=11 // pred_fallthru
          _
        // Predicated region
        $region45: #{tpu_custom_call.1} parent=11 // pred_check
          %p484 = pneg %p246
        $region46: #{tpu_custom_call.1} parent=11 // pred_check_branch
          %486 = sbr.rel (%p484) target = $region48
        $region47: #{tpu_custom_call.1} parent=11 // pred_region
          _
        $region48: #{tpu_custom_call.1} parent=11 // pred_fallthru
          _
        // Predicated region
        $region49: #{tpu_custom_call.1} parent=11 // pred_check
          %p487 = pneg %p267
        $region50: #{tpu_custom_call.1} parent=11 // pred_check_branch
          %489 = sbr.rel (%p487) target = $region52
        $region51: #{tpu_custom_call.1} parent=11 // pred_region
          _
        $region52: #{tpu_custom_call.1} parent=11 // pred_fallthru
          _
        // Predicated region
        $region53: #{tpu_custom_call.1} parent=11 // pred_check
          %p490 = pneg %p288
        $region54: #{tpu_custom_call.1} parent=11 // pred_check_branch
          %492 = sbr.rel (%p490) target = $region56
        $region55: #{tpu_custom_call.1} parent=11 // pred_region
          _
        $region56: #{tpu_custom_call.1} parent=11 // pred_fallthru
          _
        // Predicated region
        $region57: #{tpu_custom_call.1} parent=11 // pred_check
          %p493 = pneg %p309
        $region58: #{tpu_custom_call.1} parent=11 // pred_check_branch
          %495 = sbr.rel (%p493) target = $region60
        $region59: #{tpu_custom_call.1} parent=11 // pred_region
          _
        $region60: #{tpu_custom_call.1} parent=11 // pred_fallthru
          _
        // Predicated region
        $region61: #{tpu_custom_call.1} parent=11 // pred_check
          %p496 = pneg %p330
        $region62: #{tpu_custom_call.1} parent=11 // pred_check_branch
          %498 = sbr.rel (%p496) target = $region64
        $region63: #{tpu_custom_call.1} parent=11 // pred_region
          _
        $region64: #{tpu_custom_call.1} parent=11 // pred_fallthru
          _
        // Predicated region
        $region65: #{tpu_custom_call.1} parent=11 // pred_check
          %p499 = pneg %p351
        $region66: #{tpu_custom_call.1} parent=11 // pred_check_branch
          %501 = sbr.rel (%p499) target = $region68
        $region67: #{tpu_custom_call.1} parent=11 // pred_region
          _
        $region68: #{tpu_custom_call.1} parent=11 // pred_fallthru
          _
        // Predicated region
        $region69: #{tpu_custom_call.1} parent=11 // pred_check
          %p502 = pneg %p372
        $region70: #{tpu_custom_call.1} parent=11 // pred_check_branch
          %504 = sbr.rel (%p502) target = $region72
        $region71: #{tpu_custom_call.1} parent=11 // pred_region
          _
        $region72: #{tpu_custom_call.1} parent=11 // pred_fallthru
          _
        // Predicated region
        $region73: #{tpu_custom_call.1} parent=11 // pred_check
          %p505 = pneg %p393
        $region74: #{tpu_custom_call.1} parent=11 // pred_check_branch
          %507 = sbr.rel (%p505) target = $region76
        $region75: #{tpu_custom_call.1} parent=11 // pred_region
          _
        $region76: #{tpu_custom_call.1} parent=11 // pred_fallthru
          _
      $region12: #{tpu_custom_call.1} parent=5 // pred_fallthru
        _
      %p508 = scmp.lt.s32.totalorder %s31, 2
      // Predicated region
      $region77: #{tpu_custom_call.1} parent=5 // pred_check
        %p509 = pneg %p508
      $region78: #{tpu_custom_call.1} parent=5 // pred_check_branch
        %511 = sbr.rel (%p509) target = $region80
      $region79: #{tpu_custom_call.1} parent=5 // pred_region
        // Predicated region
        $region81: #{tpu_custom_call.1} parent=79 // pred_check
          %p512 = pneg %p51
        $region82: #{tpu_custom_call.1} parent=79 // pred_check_branch
          %514 = sbr.rel (%p512) target = $region84
        $region83: #{tpu_custom_call.1} parent=79 // pred_region
          %p515 = scmp.lt.s32.totalorder %s31, 1
          %s516 = scalar_select %p515, %s31, 1
          %s517 = smul.addr %s516, 8
          %s518 = scalar_lea.vmem %s0, %s517
        $region84: #{tpu_custom_call.1} parent=79 // pred_fallthru
          _
      $region80: #{tpu_custom_call.1} parent=5 // pred_fallthru
        _
      %p519 = scmp.le.s32.totalorder 1, %s31
      %p520 = scmp.lt.s32.totalorder %s31, 3
      %p521 = pnand %p519, %p520
      %p522 = pneg %p521
      // Predicated region
      $region85: #{tpu_custom_call.1} parent=5 // pred_check
        _
      $region86: #{tpu_custom_call.1} parent=5 // pred_check_branch
        %524 = sbr.rel (%p521) target = $region88
      $region87: #{tpu_custom_call.1} parent=5 // pred_region
        %s525 = ssub.s32 %s31, 1
        %p526 = scmp.lt.s32.totalorder %s36, 1
        %s527 = scalar_select %p526, %s36, 1
        %s528 = smul.addr %s527, 8
        %s529 = scalar_lea.vmem %s0, %s528
        %p530 = pneg %p57
        %p531 = pneg %p54
        %p532 = pneg %p78
        %p533 = pneg %p75
        %p534 = pneg %p99
        %p535 = pneg %p96
        %p536 = pneg %p120
        %p537 = pneg %p117
        %p538 = pneg %p141
        %p539 = pneg %p138
        %p540 = pneg %p162
        %p541 = pneg %p159
        %p542 = pneg %p183
        %p543 = pneg %p180
        %p544 = pneg %p204
        %p545 = pneg %p201
        %p546 = pneg %p225
        %p547 = pneg %p222
        %p548 = pneg %p246
        %p549 = pneg %p243
        %p550 = pneg %p267
        %p551 = pneg %p264
        %p552 = pneg %p288
        %p553 = pneg %p285
        %p554 = pneg %p309
        %p555 = pneg %p306
        %p556 = pneg %p330
        %p557 = pneg %p327
        %p558 = pneg %p351
        %p559 = pneg %p348
        %p560 = pneg %p372
        %p561 = pneg %p369
        %p562 = pneg %p393
        %p563 = pneg %p390
        %p564 = pneg %p419
        %p565 = pneg %p416
        %s566 = sand.u32 %s406, 1
        %s567 = scalar_lea.sflag [#allocation3], %s566
        %s568 = sand.u32 %s406, 1
        %s569 = smul.addr %s568, 8
        %s570 = scalar_lea.vmem [#allocation2], %s569
        %p571 = pneg %p445
        %p572 = pneg %p442
        %s573 = sand.u32 %s432, 1
        %s574 = scalar_lea.sflag [#allocation5], %s573
        %s575 = sand.u32 %s432, 1
        %s576 = smul.addr %s575, 32
        %s577 = scalar_lea.vmem [#allocation4], %s576
        %p578 = scmp.lt.s32.totalorder %s36, 1
        %s579 = scalar_select %p578, %s36, 1
        %s580 = smul.addr %s579, 8
        %s581 = scalar_lea.vmem %s0, %s580
        %v583 = vld [vmem:[%s581] sm:$0xff]
        %v584 = vpack.c.bf16 %v583, %v583
        %v585 = vld [vmem:[%s1] sm:$0xf]
        %v586 = vld [vmem:[%s1 + $0x4] sm:$0xf]
        %v587 = vld [vmem:[%s1 + $0x8] sm:$0xf]
        %v588 = vld [vmem:[%s1 + $0xc] sm:$0xf]
        %v589 = vld [vmem:[%s1 + $0x10] sm:$0xf]
        %v590 = vld [vmem:[%s1 + $0x14] sm:$0xf]
        %v591 = vld [vmem:[%s1 + $0x18] sm:$0xf]
        %v592 = vld [vmem:[%s1 + $0x1c] sm:$0xf]
        %v593 = vld [vmem:[%s1 + $0x20] sm:$0xf]
        %v594 = vld [vmem:[%s1 + $0x24] sm:$0xf]
        %v595 = vld [vmem:[%s1 + $0x28] sm:$0xf]
        %v596 = vld [vmem:[%s1 + $0x2c] sm:$0xf]
        %v597 = vld [vmem:[%s1 + $0x30] sm:$0xf]
        %v598 = vld [vmem:[%s1 + $0x34] sm:$0xf]
        %v599 = vld [vmem:[%s1 + $0x38] sm:$0xf]
        %v600 = vld [vmem:[%s1 + $0x3c] sm:$0xf]
        %v601 = vld [vmem:[%s4] sm:$0x1]
        %v602 = vld [vmem:[%s4 + $0x1] sm:$0x1]
        %v603 = vld [vmem:[%s4 + $0x2] sm:$0x1]
        %v604 = vld [vmem:[%s4 + $0x3] sm:$0x1]
        %v609 = vlaneseq
        %v610 = vshrl.u32 %v609, 7
        %v611 = vsub.s32 0, %v610
        %v612 = vrot.slane %v601, %v611
        %v613 = vlaneseq
        %v614 = vshrl.u32 %v613, 7
        %v615 = vsub.s32 0, %v614
        %v616 = vrot.slane %v602, %v615
        %v617 = vlaneseq
        %v618 = vshrl.u32 %v617, 7
        %v619 = vsub.s32 0, %v618
        %v620 = vrot.slane %v603, %v619
        %v621 = vlaneseq
        %v622 = vshrl.u32 %v621, 7
        %v623 = vsub.s32 0, %v622
        %v624 = vrot.slane %v604, %v623
        %v633 = vunpack.c.l.b16 %v585
        %v634 = vunpack.c.l.b16 %v586
        %v635 = vunpack.c.l.b16 %v587
        %v636 = vunpack.c.l.b16 %v588
        %v637 = vpack.c.b16 %v634, %v633
        %v638 = vpack.c.b16 %v636, %v635
        %vm641 = vcmask 261120
        %v643 = vsel %vm641, %v584, 0
        %645 = vmatprep.subr.bf16.mxu0 0
        %646 = vmatpush1.bf16.msra.mxu0 %v637
        %647 = vmatprep.subr.bf16.mxu0 0
        %648 = vmatpush1.bf16.msra.mxu0 %v638
        %649 = vmatprep.subr.bf16.mxu0 0
        %650 = vmatpush1.bf16.msra.mxu0 0
        %651 = vmatprep.subr.bf16.mxu0 0
        %652 = vmatpush1.bf16.msra.mxu0 0
        %653 = vmatprep.subr.bf16.mxu0 0
        %654 = vmatpush1.bf16.msra.mxu0 0
        %655 = vmatprep.subr.bf16.mxu0 0
        %656 = vmatpush1.bf16.msra.mxu0 0
        %657 = vmatprep.subr.bf16.mxu0 0
        %658 = vmatpush1.bf16.msra.mxu0 0
        %659 = vmatprep.subr.bf16.mxu0 0
        %660 = vmatpush1.bf16.msra.mxu0 0
        %661 = vmatprep.subr.bf16.mxu0 0
        %662 = vmatpush1.bf16.msra.mxu0 0
        %663 = vmatprep.subr.bf16.mxu0 0
        %664 = vmatpush1.bf16.msra.mxu0 0
        %665 = vmatprep.subr.bf16.mxu0 0
        %666 = vmatpush1.bf16.msra.mxu0 0
        %667 = vmatprep.subr.bf16.mxu0 0
        %668 = vmatpush1.bf16.msra.mxu0 0
        %669 = vmatprep.subr.bf16.mxu0 0
        %670 = vmatpush1.bf16.msra.mxu0 0
        %671 = vmatprep.subr.bf16.mxu0 0
        %672 = vmatpush1.bf16.msra.mxu0 0
        %673 = vmatprep.subr.bf16.mxu0 0
        %674 = vmatpush1.bf16.msra.mxu0 0
        %675 = vmatprep.subr.bf16.mxu0 0
        %676 = vmatpush1.bf16.msra.mxu0 0
        %677 = vmatprep.mubr.bf16.mxu0 0
        %678 = vmatmul.mubr.bf16.gmra.mrb[0].mxu0 %v643
        %v679 = vpop.f32.mrb[0].mxu0
        %v680 = vadd.f32 %v612, %v679
        %v681 = vpop.f32.mrb[0].mxu0
        %v682 = vpop.f32.mrb[0].mxu0
        %v683 = vpop.f32.mrb[0].mxu0
        %684 = vdwg.mxu0
        %v689 = vunpack.c.l.b16 %v589
        %v690 = vunpack.c.l.b16 %v590
        %v691 = vunpack.c.l.b16 %v591
        %v692 = vunpack.c.l.b16 %v592
        %v693 = vpack.c.b16 %v690, %v689
        %v694 = vpack.c.b16 %v692, %v691
        %697 = vmatprep.subr.bf16.mxu0 0
        %698 = vmatpush1.bf16.msra.mxu0 %v693
        %699 = vmatprep.subr.bf16.mxu0 0
        %700 = vmatpush1.bf16.msra.mxu0 %v694
        %701 = vmatprep.subr.bf16.mxu0 0
        %702 = vmatpush1.bf16.msra.mxu0 0
        %703 = vmatprep.subr.bf16.mxu0 0
        %704 = vmatpush1.bf16.msra.mxu0 0
        %705 = vmatprep.subr.bf16.mxu0 0
        %706 = vmatpush1.bf16.msra.mxu0 0
        %707 = vmatprep.subr.bf16.mxu0 0
        %708 = vmatpush1.bf16.msra.mxu0 0
        %709 = vmatprep.subr.bf16.mxu0 0
        %710 = vmatpush1.bf16.msra.mxu0 0
        %711 = vmatprep.subr.bf16.mxu0 0
        %712 = vmatpush1.bf16.msra.mxu0 0
        %713 = vmatprep.subr.bf16.mxu0 0
        %714 = vmatpush1.bf16.msra.mxu0 0
        %715 = vmatprep.subr.bf16.mxu0 0
        %716 = vmatpush1.bf16.msra.mxu0 0
        %717 = vmatprep.subr.bf16.mxu0 0
        %718 = vmatpush1.bf16.msra.mxu0 0
        %719 = vmatprep.subr.bf16.mxu0 0
        %720 = vmatpush1.bf16.msra.mxu0 0
        %721 = vmatprep.subr.bf16.mxu0 0
        %722 = vmatpush1.bf16.msra.mxu0 0
        %723 = vmatprep.subr.bf16.mxu0 0
        %724 = vmatpush1.bf16.msra.mxu0 0
        %725 = vmatprep.subr.bf16.mxu0 0
        %726 = vmatpush1.bf16.msra.mxu0 0
        %727 = vmatprep.subr.bf16.mxu0 0
        %728 = vmatpush1.bf16.msra.mxu0 0
        %729 = vmatprep.mubr.bf16.mxu0 0
        %730 = vmatmul.mubr.bf16.gmra.mrb[0].mxu0 %v643
        %v731 = vpop.f32.mrb[0].mxu0
        %v732 = vadd.f32 %v616, %v731
        %v733 = vpop.f32.mrb[0].mxu0
        %v734 = vpop.f32.mrb[0].mxu0
        %v735 = vpop.f32.mrb[0].mxu0
        %736 = vdwg.mxu0
        %v741 = vunpack.c.l.b16 %v593
        %v742 = vunpack.c.l.b16 %v594
        %v743 = vunpack.c.l.b16 %v595
        %v744 = vunpack.c.l.b16 %v596
        %v745 = vpack.c.b16 %v742, %v741
        %v746 = vpack.c.b16 %v744, %v743
        %749 = vmatprep.subr.bf16.mxu0 0
        %750 = vmatpush1.bf16.msra.mxu0 %v745
        %751 = vmatprep.subr.bf16.mxu0 0
        %752 = vmatpush1.bf16.msra.mxu0 %v746
        %753 = vmatprep.subr.bf16.mxu0 0
        %754 = vmatpush1.bf16.msra.mxu0 0
        %755 = vmatprep.subr.bf16.mxu0 0
        %756 = vmatpush1.bf16.msra.mxu0 0
        %757 = vmatprep.subr.bf16.mxu0 0
        %758 = vmatpush1.bf16.msra.mxu0 0
        %759 = vmatprep.subr.bf16.mxu0 0
        %760 = vmatpush1.bf16.msra.mxu0 0
        %761 = vmatprep.subr.bf16.mxu0 0
        %762 = vmatpush1.bf16.msra.mxu0 0
        %763 = vmatprep.subr.bf16.mxu0 0
        %764 = vmatpush1.bf16.msra.mxu0 0
        %765 = vmatprep.subr.bf16.mxu0 0
        %766 = vmatpush1.bf16.msra.mxu0 0
        %767 = vmatprep.subr.bf16.mxu0 0
        %768 = vmatpush1.bf16.msra.mxu0 0
        %769 = vmatprep.subr.bf16.mxu0 0
        %770 = vmatpush1.bf16.msra.mxu0 0
        %771 = vmatprep.subr.bf16.mxu0 0
        %772 = vmatpush1.bf16.msra.mxu0 0
        %773 = vmatprep.subr.bf16.mxu0 0
        %774 = vmatpush1.bf16.msra.mxu0 0
        %775 = vmatprep.subr.bf16.mxu0 0
        %776 = vmatpush1.bf16.msra.mxu0 0
        %777 = vmatprep.subr.bf16.mxu0 0
        %778 = vmatpush1.bf16.msra.mxu0 0
        %779 = vmatprep.subr.bf16.mxu0 0
        %780 = vmatpush1.bf16.msra.mxu0 0
        %781 = vmatprep.mubr.bf16.mxu0 0
        %782 = vmatmul.mubr.bf16.gmra.mrb[0].mxu0 %v643
        %v783 = vpop.f32.mrb[0].mxu0
        %v784 = vadd.f32 %v620, %v783
        %v785 = vpop.f32.mrb[0].mxu0
        %v786 = vpop.f32.mrb[0].mxu0
        %v787 = vpop.f32.mrb[0].mxu0
        %788 = vdwg.mxu0
        %v793 = vunpack.c.l.b16 %v597
        %v794 = vunpack.c.l.b16 %v598
        %v795 = vunpack.c.l.b16 %v599
        %v796 = vunpack.c.l.b16 %v600
        %v797 = vpack.c.b16 %v794, %v793
        %v798 = vpack.c.b16 %v796, %v795
        %801 = vmatprep.subr.bf16.mxu0 0
        %802 = vmatpush1.bf16.msra.mxu0 %v797
        %803 = vmatprep.subr.bf16.mxu0 0
        %804 = vmatpush1.bf16.msra.mxu0 %v798
        %805 = vmatprep.subr.bf16.mxu0 0
        %806 = vmatpush1.bf16.msra.mxu0 0
        %807 = vmatprep.subr.bf16.mxu0 0
        %808 = vmatpush1.bf16.msra.mxu0 0
        %809 = vmatprep.subr.bf16.mxu0 0
        %810 = vmatpush1.bf16.msra.mxu0 0
        %811 = vmatprep.subr.bf16.mxu0 0
        %812 = vmatpush1.bf16.msra.mxu0 0
        %813 = vmatprep.subr.bf16.mxu0 0
        %814 = vmatpush1.bf16.msra.mxu0 0
        %815 = vmatprep.subr.bf16.mxu0 0
        %816 = vmatpush1.bf16.msra.mxu0 0
        %817 = vmatprep.subr.bf16.mxu0 0
        %818 = vmatpush1.bf16.msra.mxu0 0
        %819 = vmatprep.subr.bf16.mxu0 0
        %820 = vmatpush1.bf16.msra.mxu0 0
        %821 = vmatprep.subr.bf16.mxu0 0
        %822 = vmatpush1.bf16.msra.mxu0 0
        %823 = vmatprep.subr.bf16.mxu0 0
        %824 = vmatpush1.bf16.msra.mxu0 0
        %825 = vmatprep.subr.bf16.mxu0 0
        %826 = vmatpush1.bf16.msra.mxu0 0
        %827 = vmatprep.subr.bf16.mxu0 0
        %828 = vmatpush1.bf16.msra.mxu0 0
        %829 = vmatprep.subr.bf16.mxu0 0
        %830 = vmatpush1.bf16.msra.mxu0 0
        %831 = vmatprep.subr.bf16.mxu0 0
        %832 = vmatpush1.bf16.msra.mxu0 0
        %833 = vmatprep.mubr.bf16.mxu0 0
        %834 = vmatmul.mubr.bf16.gmra.mrb[0].mxu0 %v643
        %v835 = vpop.f32.mrb[0].mxu0
        %v836 = vadd.f32 %v624, %v835
        %v837 = vpop.f32.mrb[0].mxu0
        %v838 = vpop.f32.mrb[0].mxu0
        %v839 = vpop.f32.mrb[0].mxu0
        %840 = vdwg.mxu0
        %v841 = vld [vmem:[%s2] sm:$0xf]
        %v842 = vld [vmem:[%s2 + $0x4] sm:$0xf]
        %v843 = vld [vmem:[%s2 + $0x8] sm:$0xf]
        %v844 = vld [vmem:[%s2 + $0xc] sm:$0xf]
        %v845 = vld [vmem:[%s2 + $0x10] sm:$0xf]
        %v846 = vld [vmem:[%s2 + $0x14] sm:$0xf]
        %v847 = vld [vmem:[%s2 + $0x18] sm:$0xf]
        %v848 = vld [vmem:[%s2 + $0x1c] sm:$0xf]
        %v849 = vld [vmem:[%s2 + $0x20] sm:$0xf]
        %v850 = vld [vmem:[%s2 + $0x24] sm:$0xf]
        %v851 = vld [vmem:[%s2 + $0x28] sm:$0xf]
        %v852 = vld [vmem:[%s2 + $0x2c] sm:$0xf]
        %v853 = vld [vmem:[%s2 + $0x30] sm:$0xf]
        %v854 = vld [vmem:[%s2 + $0x34] sm:$0xf]
        %v855 = vld [vmem:[%s2 + $0x38] sm:$0xf]
        %v856 = vld [vmem:[%s2 + $0x3c] sm:$0xf]
        %v857 = vld [vmem:[%s5] sm:$0x1]
        %v858 = vld [vmem:[%s5 + $0x1] sm:$0x1]
        %v859 = vld [vmem:[%s5 + $0x2] sm:$0x1]
        %v860 = vld [vmem:[%s5 + $0x3] sm:$0x1]
        %v865 = vlaneseq
        %v866 = vshrl.u32 %v865, 7
        %v867 = vsub.s32 0, %v866
        %v868 = vrot.slane %v857, %v867
        %v869 = vlaneseq
        %v870 = vshrl.u32 %v869, 7
        %v871 = vsub.s32 0, %v870
        %v872 = vrot.slane %v858, %v871
        %v873 = vlaneseq
        %v874 = vshrl.u32 %v873, 7
        %v875 = vsub.s32 0, %v874
        %v876 = vrot.slane %v859, %v875
        %v877 = vlaneseq
        %v878 = vshrl.u32 %v877, 7
        %v879 = vsub.s32 0, %v878
        %v880 = vrot.slane %v860, %v879
        %v889 = vunpack.c.l.b16 %v841
        %v890 = vunpack.c.l.b16 %v842
        %v891 = vunpack.c.l.b16 %v843
        %v892 = vunpack.c.l.b16 %v844
        %v893 = vpack.c.b16 %v890, %v889
        %v894 = vpack.c.b16 %v892, %v891
        %897 = vmatprep.subr.bf16.mxu0 0
        %898 = vmatpush1.bf16.msra.mxu0 %v893
        %899 = vmatprep.subr.bf16.mxu0 0
        %900 = vmatpush1.bf16.msra.mxu0 %v894
        %901 = vmatprep.subr.bf16.mxu0 0
        %902 = vmatpush1.bf16.msra.mxu0 0
        %903 = vmatprep.subr.bf16.mxu0 0
        %904 = vmatpush1.bf16.msra.mxu0 0
        %905 = vmatprep.subr.bf16.mxu0 0
        %906 = vmatpush1.bf16.msra.mxu0 0
        %907 = vmatprep.subr.bf16.mxu0 0
        %908 = vmatpush1.bf16.msra.mxu0 0
        %909 = vmatprep.subr.bf16.mxu0 0
        %910 = vmatpush1.bf16.msra.mxu0 0
        %911 = vmatprep.subr.bf16.mxu0 0
        %912 = vmatpush1.bf16.msra.mxu0 0
        %913 = vmatprep.subr.bf16.mxu0 0
        %914 = vmatpush1.bf16.msra.mxu0 0
        %915 = vmatprep.subr.bf16.mxu0 0
        %916 = vmatpush1.bf16.msra.mxu0 0
        %917 = vmatprep.subr.bf16.mxu0 0
        %918 = vmatpush1.bf16.msra.mxu0 0
        %919 = vmatprep.subr.bf16.mxu0 0
        %920 = vmatpush1.bf16.msra.mxu0 0
        %921 = vmatprep.subr.bf16.mxu0 0
        %922 = vmatpush1.bf16.msra.mxu0 0
        %923 = vmatprep.subr.bf16.mxu0 0
        %924 = vmatpush1.bf16.msra.mxu0 0
        %925 = vmatprep.subr.bf16.mxu0 0
        %926 = vmatpush1.bf16.msra.mxu0 0
        %927 = vmatprep.subr.bf16.mxu0 0
        %928 = vmatpush1.bf16.msra.mxu0 0
        %929 = vmatprep.mubr.bf16.mxu0 0
        %930 = vmatmul.mubr.bf16.gmra.mrb[0].mxu0 %v643
        %v931 = vpop.f32.mrb[0].mxu0
        %v932 = vadd.f32 %v868, %v931
        %v933 = vpop.f32.mrb[0].mxu0
        %v934 = vpop.f32.mrb[0].mxu0
        %v935 = vpop.f32.mrb[0].mxu0
        %936 = vdwg.mxu0
        %v941 = vunpack.c.l.b16 %v845
        %v942 = vunpack.c.l.b16 %v846
        %v943 = vunpack.c.l.b16 %v847
        %v944 = vunpack.c.l.b16 %v848
        %v945 = vpack.c.b16 %v942, %v941
        %v946 = vpack.c.b16 %v944, %v943
        %949 = vmatprep.subr.bf16.mxu0 0
        %950 = vmatpush1.bf16.msra.mxu0 %v945
        %951 = vmatprep.subr.bf16.mxu0 0
        %952 = vmatpush1.bf16.msra.mxu0 %v946
        %953 = vmatprep.subr.bf16.mxu0 0
        %954 = vmatpush1.bf16.msra.mxu0 0
        %955 = vmatprep.subr.bf16.mxu0 0
        %956 = vmatpush1.bf16.msra.mxu0 0
        %957 = vmatprep.subr.bf16.mxu0 0
        %958 = vmatpush1.bf16.msra.mxu0 0
        %959 = vmatprep.subr.bf16.mxu0 0
        %960 = vmatpush1.bf16.msra.mxu0 0
        %961 = vmatprep.subr.bf16.mxu0 0
        %962 = vmatpush1.bf16.msra.mxu0 0
        %963 = vmatprep.subr.bf16.mxu0 0
        %964 = vmatpush1.bf16.msra.mxu0 0
        %965 = vmatprep.subr.bf16.mxu0 0
        %966 = vmatpush1.bf16.msra.mxu0 0
        %967 = vmatprep.subr.bf16.mxu0 0
        %968 = vmatpush1.bf16.msra.mxu0 0
        %969 = vmatprep.subr.bf16.mxu0 0
        %970 = vmatpush1.bf16.msra.mxu0 0
        %971 = vmatprep.subr.bf16.mxu0 0
        %972 = vmatpush1.bf16.msra.mxu0 0
        %973 = vmatprep.subr.bf16.mxu0 0
        %974 = vmatpush1.bf16.msra.mxu0 0
        %975 = vmatprep.subr.bf16.mxu0 0
        %976 = vmatpush1.bf16.msra.mxu0 0
        %977 = vmatprep.subr.bf16.mxu0 0
        %978 = vmatpush1.bf16.msra.mxu0 0
        %979 = vmatprep.subr.bf16.mxu0 0
        %980 = vmatpush1.bf16.msra.mxu0 0
        %981 = vmatprep.mubr.bf16.mxu0 0
        %982 = vmatmul.mubr.bf16.gmra.mrb[0].mxu0 %v643
        %v983 = vpop.f32.mrb[0].mxu0
        %v984 = vadd.f32 %v872, %v983
        %v985 = vpop.f32.mrb[0].mxu0
        %v986 = vpop.f32.mrb[0].mxu0
        %v987 = vpop.f32.mrb[0].mxu0
        %988 = vdwg.mxu0
        %v993 = vunpack.c.l.b16 %v849
        %v994 = vunpack.c.l.b16 %v850
        %v995 = vunpack.c.l.b16 %v851
        %v996 = vunpack.c.l.b16 %v852
        %v997 = vpack.c.b16 %v994, %v993
        %v998 = vpack.c.b16 %v996, %v995
        %1001 = vmatprep.subr.bf16.mxu0 0
        %1002 = vmatpush1.bf16.msra.mxu0 %v997
        %1003 = vmatprep.subr.bf16.mxu0 0
        %1004 = vmatpush1.bf16.msra.mxu0 %v998
        %1005 = vmatprep.subr.bf16.mxu0 0
        %1006 = vmatpush1.bf16.msra.mxu0 0
        %1007 = vmatprep.subr.bf16.mxu0 0
        %1008 = vmatpush1.bf16.msra.mxu0 0
        %1009 = vmatprep.subr.bf16.mxu0 0
        %1010 = vmatpush1.bf16.msra.mxu0 0
        %1011 = vmatprep.subr.bf16.mxu0 0
        %1012 = vmatpush1.bf16.msra.mxu0 0
        %1013 = vmatprep.subr.bf16.mxu0 0
        %1014 = vmatpush1.bf16.msra.mxu0 0
        %1015 = vmatprep.subr.bf16.mxu0 0
        %1016 = vmatpush1.bf16.msra.mxu0 0
        %1017 = vmatprep.subr.bf16.mxu0 0
        %1018 = vmatpush1.bf16.msra.mxu0 0
        %1019 = vmatprep.subr.bf16.mxu0 0
        %1020 = vmatpush1.bf16.msra.mxu0 0
        %1021 = vmatprep.subr.bf16.mxu0 0
        %1022 = vmatpush1.bf16.msra.mxu0 0
        %1023 = vmatprep.subr.bf16.mxu0 0
        %1024 = vmatpush1.bf16.msra.mxu0 0
        %1025 = vmatprep.subr.bf16.mxu0 0
        %1026 = vmatpush1.bf16.msra.mxu0 0
        %1027 = vmatprep.subr.bf16.mxu0 0
        %1028 = vmatpush1.bf16.msra.mxu0 0
        %1029 = vmatprep.subr.bf16.mxu0 0
        %1030 = vmatpush1.bf16.msra.mxu0 0
        %1031 = vmatprep.subr.bf16.mxu0 0
        %1032 = vmatpush1.bf16.msra.mxu0 0
        %1033 = vmatprep.mubr.bf16.mxu0 0
        %1034 = vmatmul.mubr.bf16.gmra.mrb[0].mxu0 %v643
        %v1035 = vpop.f32.mrb[0].mxu0
        %v1036 = vadd.f32 %v876, %v1035
        %v1037 = vpop.f32.mrb[0].mxu0
        %v1038 = vpop.f32.mrb[0].mxu0
        %v1039 = vpop.f32.mrb[0].mxu0
        %1040 = vdwg.mxu0
        %v1045 = vunpack.c.l.b16 %v853
        %v1046 = vunpack.c.l.b16 %v854
        %v1047 = vunpack.c.l.b16 %v855
        %v1048 = vunpack.c.l.b16 %v856
        %v1049 = vpack.c.b16 %v1046, %v1045
        %v1050 = vpack.c.b16 %v1048, %v1047
        %1053 = vmatprep.subr.bf16.mxu0 0
        %1054 = vmatpush1.bf16.msra.mxu0 %v1049
        %1055 = vmatprep.subr.bf16.mxu0 0
        %1056 = vmatpush1.bf16.msra.mxu0 %v1050
        %1057 = vmatprep.subr.bf16.mxu0 0
        %1058 = vmatpush1.bf16.msra.mxu0 0
        %1059 = vmatprep.subr.bf16.mxu0 0
        %1060 = vmatpush1.bf16.msra.mxu0 0
        %1061 = vmatprep.subr.bf16.mxu0 0
        %1062 = vmatpush1.bf16.msra.mxu0 0
        %1063 = vmatprep.subr.bf16.mxu0 0
        %1064 = vmatpush1.bf16.msra.mxu0 0
        %1065 = vmatprep.subr.bf16.mxu0 0
        %1066 = vmatpush1.bf16.msra.mxu0 0
        %1067 = vmatprep.subr.bf16.mxu0 0
        %1068 = vmatpush1.bf16.msra.mxu0 0
        %1069 = vmatprep.subr.bf16.mxu0 0
        %1070 = vmatpush1.bf16.msra.mxu0 0
        %1071 = vmatprep.subr.bf16.mxu0 0
        %1072 = vmatpush1.bf16.msra.mxu0 0
        %1073 = vmatprep.subr.bf16.mxu0 0
        %1074 = vmatpush1.bf16.msra.mxu0 0
        %1075 = vmatprep.subr.bf16.mxu0 0
        %1076 = vmatpush1.bf16.msra.mxu0 0
        %1077 = vmatprep.subr.bf16.mxu0 0
        %1078 = vmatpush1.bf16.msra.mxu0 0
        %1079 = vmatprep.subr.bf16.mxu0 0
        %1080 = vmatpush1.bf16.msra.mxu0 0
        %1081 = vmatprep.subr.bf16.mxu0 0
        %1082 = vmatpush1.bf16.msra.mxu0 0
        %1083 = vmatprep.subr.bf16.mxu0 0
        %1084 = vmatpush1.bf16.msra.mxu0 0
        %1085 = vmatprep.mubr.bf16.mxu0 0
        %1086 = vmatmul.mubr.bf16.gmra.mrb[0].mxu0 %v643
        %v1087 = vpop.f32.mrb[0].mxu0
        %v1088 = vadd.f32 %v880, %v1087
        %v1089 = vpop.f32.mrb[0].mxu0
        %v1090 = vpop.f32.mrb[0].mxu0
        %v1091 = vpop.f32.mrb[0].mxu0
        %1092 = vdwg.mxu0
        %v1093 = vld [vmem:[%s3] sm:$0xf]
        %v1094 = vld [vmem:[%s3 + $0x4] sm:$0xf]
        %v1095 = vld [vmem:[%s3 + $0x8] sm:$0xf]
        %v1096 = vld [vmem:[%s3 + $0xc] sm:$0xf]
        %v1097 = vld [vmem:[%s3 + $0x10] sm:$0xf]
        %v1098 = vld [vmem:[%s3 + $0x14] sm:$0xf]
        %v1099 = vld [vmem:[%s3 + $0x18] sm:$0xf]
        %v1100 = vld [vmem:[%s3 + $0x1c] sm:$0xf]
        %v1101 = vld [vmem:[%s3 + $0x20] sm:$0xf]
        %v1102 = vld [vmem:[%s3 + $0x24] sm:$0xf]
        %v1103 = vld [vmem:[%s3 + $0x28] sm:$0xf]
        %v1104 = vld [vmem:[%s3 + $0x2c] sm:$0xf]
        %v1105 = vld [vmem:[%s3 + $0x30] sm:$0xf]
        %v1106 = vld [vmem:[%s3 + $0x34] sm:$0xf]
        %v1107 = vld [vmem:[%s3 + $0x38] sm:$0xf]
        %v1108 = vld [vmem:[%s3 + $0x3c] sm:$0xf]
        %v1109 = vld [vmem:[%s6] sm:$0x1]
        %v1110 = vld [vmem:[%s6 + $0x1] sm:$0x1]
        %v1111 = vld [vmem:[%s6 + $0x2] sm:$0x1]
        %v1112 = vld [vmem:[%s6 + $0x3] sm:$0x1]
        %v1117 = vlaneseq
        %v1118 = vshrl.u32 %v1117, 7
        %v1119 = vsub.s32 0, %v1118
        %v1120 = vrot.slane %v1109, %v1119
        %v1121 = vlaneseq
        %v1122 = vshrl.u32 %v1121, 7
        %v1123 = vsub.s32 0, %v1122
        %v1124 = vrot.slane %v1110, %v1123
        %v1125 = vlaneseq
        %v1126 = vshrl.u32 %v1125, 7
        %v1127 = vsub.s32 0, %v1126
        %v1128 = vrot.slane %v1111, %v1127
        %v1129 = vlaneseq
        %v1130 = vshrl.u32 %v1129, 7
        %v1131 = vsub.s32 0, %v1130
        %v1132 = vrot.slane %v1112, %v1131
        %v1141 = vunpack.c.l.b16 %v1093
        %v1142 = vunpack.c.l.b16 %v1094
        %v1143 = vunpack.c.l.b16 %v1095
        %v1144 = vunpack.c.l.b16 %v1096
        %v1145 = vpack.c.b16 %v1142, %v1141
        %v1146 = vpack.c.b16 %v1144, %v1143
        %1149 = vmatprep.subr.bf16.mxu0 0
        %1150 = vmatpush1.bf16.msra.mxu0 %v1145
        %1151 = vmatprep.subr.bf16.mxu0 0
        %1152 = vmatpush1.bf16.msra.mxu0 %v1146
        %1153 = vmatprep.subr.bf16.mxu0 0
        %1154 = vmatpush1.bf16.msra.mxu0 0
        %1155 = vmatprep.subr.bf16.mxu0 0
        %1156 = vmatpush1.bf16.msra.mxu0 0
        %1157 = vmatprep.subr.bf16.mxu0 0
        %1158 = vmatpush1.bf16.msra.mxu0 0
        %1159 = vmatprep.subr.bf16.mxu0 0
        %1160 = vmatpush1.bf16.msra.mxu0 0
        %1161 = vmatprep.subr.bf16.mxu0 0
        %1162 = vmatpush1.bf16.msra.mxu0 0
        %1163 = vmatprep.subr.bf16.mxu0 0
        %1164 = vmatpush1.bf16.msra.mxu0 0
        %1165 = vmatprep.subr.bf16.mxu0 0
        %1166 = vmatpush1.bf16.msra.mxu0 0
        %1167 = vmatprep.subr.bf16.mxu0 0
        %1168 = vmatpush1.bf16.msra.mxu0 0
        %1169 = vmatprep.subr.bf16.mxu0 0
        %1170 = vmatpush1.bf16.msra.mxu0 0
        %1171 = vmatprep.subr.bf16.mxu0 0
        %1172 = vmatpush1.bf16.msra.mxu0 0
        %1173 = vmatprep.subr.bf16.mxu0 0
        %1174 = vmatpush1.bf16.msra.mxu0 0
        %1175 = vmatprep.subr.bf16.mxu0 0
        %1176 = vmatpush1.bf16.msra.mxu0 0
        %1177 = vmatprep.subr.bf16.mxu0 0
        %1178 = vmatpush1.bf16.msra.mxu0 0
        %1179 = vmatprep.subr.bf16.mxu0 0
        %1180 = vmatpush1.bf16.msra.mxu0 0
        %1181 = vmatprep.mubr.bf16.mxu0 0
        %1182 = vmatmul.mubr.bf16.gmra.mrb[0].mxu0 %v643
        %v1183 = vpop.f32.mrb[0].mxu0
        %v1184 = vadd.f32 %v1120, %v1183
        %v1185 = vpop.f32.mrb[0].mxu0
        %v1186 = vpop.f32.mrb[0].mxu0
        %v1187 = vpop.f32.mrb[0].mxu0
        %1188 = vdwg.mxu0
        %v1193 = vunpack.c.l.b16 %v1097
        %v1194 = vunpack.c.l.b16 %v1098
        %v1195 = vunpack.c.l.b16 %v1099
        %v1196 = vunpack.c.l.b16 %v1100
        %v1197 = vpack.c.b16 %v1194, %v1193
        %v1198 = vpack.c.b16 %v1196, %v1195
        %1201 = vmatprep.subr.bf16.mxu0 0
        %1202 = vmatpush1.bf16.msra.mxu0 %v1197
        %1203 = vmatprep.subr.bf16.mxu0 0
        %1204 = vmatpush1.bf16.msra.mxu0 %v1198
        %1205 = vmatprep.subr.bf16.mxu0 0
        %1206 = vmatpush1.bf16.msra.mxu0 0
        %1207 = vmatprep.subr.bf16.mxu0 0
        %1208 = vmatpush1.bf16.msra.mxu0 0
        %1209 = vmatprep.subr.bf16.mxu0 0
        %1210 = vmatpush1.bf16.msra.mxu0 0
        %1211 = vmatprep.subr.bf16.mxu0 0
        %1212 = vmatpush1.bf16.msra.mxu0 0
        %1213 = vmatprep.subr.bf16.mxu0 0
        %1214 = vmatpush1.bf16.msra.mxu0 0
        %1215 = vmatprep.subr.bf16.mxu0 0
        %1216 = vmatpush1.bf16.msra.mxu0 0
        %1217 = vmatprep.subr.bf16.mxu0 0
        %1218 = vmatpush1.bf16.msra.mxu0 0
        %1219 = vmatprep.subr.bf16.mxu0 0
        %1220 = vmatpush1.bf16.msra.mxu0 0
        %1221 = vmatprep.subr.bf16.mxu0 0
        %1222 = vmatpush1.bf16.msra.mxu0 0
        %1223 = vmatprep.subr.bf16.mxu0 0
        %1224 = vmatpush1.bf16.msra.mxu0 0
        %1225 = vmatprep.subr.bf16.mxu0 0
        %1226 = vmatpush1.bf16.msra.mxu0 0
        %1227 = vmatprep.subr.bf16.mxu0 0
        %1228 = vmatpush1.bf16.msra.mxu0 0
        %1229 = vmatprep.subr.bf16.mxu0 0
        %1230 = vmatpush1.bf16.msra.mxu0 0
        %1231 = vmatprep.subr.bf16.mxu0 0
        %1232 = vmatpush1.bf16.msra.mxu0 0
        %1233 = vmatprep.mubr.bf16.mxu0 0
        %1234 = vmatmul.mubr.bf16.gmra.mrb[0].mxu0 %v643
        %v1235 = vpop.f32.mrb[0].mxu0
        %v1236 = vadd.f32 %v1124, %v1235
        %v1237 = vpop.f32.mrb[0].mxu0
        %v1238 = vpop.f32.mrb[0].mxu0
        %v1239 = vpop.f32.mrb[0].mxu0
        %1240 = vdwg.mxu0
        %v1245 = vunpack.c.l.b16 %v1101
        %v1246 = vunpack.c.l.b16 %v1102
        %v1247 = vunpack.c.l.b16 %v1103
        %v1248 = vunpack.c.l.b16 %v1104
        %v1249 = vpack.c.b16 %v1246, %v1245
        %v1250 = vpack.c.b16 %v1248, %v1247
        %1253 = vmatprep.subr.bf16.mxu0 0
        %1254 = vmatpush1.bf16.msra.mxu0 %v1249
        %1255 = vmatprep.subr.bf16.mxu0 0
        %1256 = vmatpush1.bf16.msra.mxu0 %v1250
        %1257 = vmatprep.subr.bf16.mxu0 0
        %1258 = vmatpush1.bf16.msra.mxu0 0
        %1259 = vmatprep.subr.bf16.mxu0 0
        %1260 = vmatpush1.bf16.msra.mxu0 0
        %1261 = vmatprep.subr.bf16.mxu0 0
        %1262 = vmatpush1.bf16.msra.mxu0 0
        %1263 = vmatprep.subr.bf16.mxu0 0
        %1264 = vmatpush1.bf16.msra.mxu0 0
        %1265 = vmatprep.subr.bf16.mxu0 0
        %1266 = vmatpush1.bf16.msra.mxu0 0
        %1267 = vmatprep.subr.bf16.mxu0 0
        %1268 = vmatpush1.bf16.msra.mxu0 0
        %1269 = vmatprep.subr.bf16.mxu0 0
        %1270 = vmatpush1.bf16.msra.mxu0 0
        %1271 = vmatprep.subr.bf16.mxu0 0
        %1272 = vmatpush1.bf16.msra.mxu0 0
        %1273 = vmatprep.subr.bf16.mxu0 0
        %1274 = vmatpush1.bf16.msra.mxu0 0
        %1275 = vmatprep.subr.bf16.mxu0 0
        %1276 = vmatpush1.bf16.msra.mxu0 0
        %1277 = vmatprep.subr.bf16.mxu0 0
        %1278 = vmatpush1.bf16.msra.mxu0 0
        %1279 = vmatprep.subr.bf16.mxu0 0
        %1280 = vmatpush1.bf16.msra.mxu0 0
        %1281 = vmatprep.subr.bf16.mxu0 0
        %1282 = vmatpush1.bf16.msra.mxu0 0
        %1283 = vmatprep.subr.bf16.mxu0 0
        %1284 = vmatpush1.bf16.msra.mxu0 0
        %1285 = vmatprep.mubr.bf16.mxu0 0
        %1286 = vmatmul.mubr.bf16.gmra.mrb[0].mxu0 %v643
        %v1287 = vpop.f32.mrb[0].mxu0
        %v1288 = vadd.f32 %v1128, %v1287
        %v1289 = vpop.f32.mrb[0].mxu0
        %v1290 = vpop.f32.mrb[0].mxu0
        %v1291 = vpop.f32.mrb[0].mxu0
        %1292 = vdwg.mxu0
        %v1297 = vunpack.c.l.b16 %v1105
        %v1298 = vunpack.c.l.b16 %v1106
        %v1299 = vunpack.c.l.b16 %v1107
        %v1300 = vunpack.c.l.b16 %v1108
        %v1301 = vpack.c.b16 %v1298, %v1297
        %v1302 = vpack.c.b16 %v1300, %v1299
        %1305 = vmatprep.subr.bf16.mxu0 0
        %1306 = vmatpush1.bf16.msra.mxu0 %v1301
        %1307 = vmatprep.subr.bf16.mxu0 0
        %1308 = vmatpush1.bf16.msra.mxu0 %v1302
        %1309 = vmatprep.subr.bf16.mxu0 0
        %1310 = vmatpush1.bf16.msra.mxu0 0
        %1311 = vmatprep.subr.bf16.mxu0 0
        %1312 = vmatpush1.bf16.msra.mxu0 0
        %1313 = vmatprep.subr.bf16.mxu0 0
        %1314 = vmatpush1.bf16.msra.mxu0 0
        %1315 = vmatprep.subr.bf16.mxu0 0
        %1316 = vmatpush1.bf16.msra.mxu0 0
        %1317 = vmatprep.subr.bf16.mxu0 0
        %1318 = vmatpush1.bf16.msra.mxu0 0
        %1319 = vmatprep.subr.bf16.mxu0 0
        %1320 = vmatpush1.bf16.msra.mxu0 0
        %1321 = vmatprep.subr.bf16.mxu0 0
        %1322 = vmatpush1.bf16.msra.mxu0 0
        %1323 = vmatprep.subr.bf16.mxu0 0
        %1324 = vmatpush1.bf16.msra.mxu0 0
        %1325 = vmatprep.subr.bf16.mxu0 0
        %1326 = vmatpush1.bf16.msra.mxu0 0
        %1327 = vmatprep.subr.bf16.mxu0 0
        %1328 = vmatpush1.bf16.msra.mxu0 0
        %1329 = vmatprep.subr.bf16.mxu0 0
        %1330 = vmatpush1.bf16.msra.mxu0 0
        %1331 = vmatprep.subr.bf16.mxu0 0
        %1332 = vmatpush1.bf16.msra.mxu0 0
        %1333 = vmatprep.subr.bf16.mxu0 0
        %1334 = vmatpush1.bf16.msra.mxu0 0
        %1335 = vmatprep.subr.bf16.mxu0 0
        %1336 = vmatpush1.bf16.msra.mxu0 0
        %1337 = vmatprep.mubr.bf16.mxu0 0
        %1338 = vmatmul.mubr.bf16.gmra.mrb[0].mxu0 %v643
        %v1339 = vpop.f32.mrb[0].mxu0
        %v1340 = vadd.f32 %v1132, %v1339
        %v1341 = vpop.f32.mrb[0].mxu0
        %v1342 = vpop.f32.mrb[0].mxu0
        %v1343 = vpop.f32.mrb[0].mxu0
        %1344 = vdwg.mxu0
        %v1345 = vpack.c.bf16 %v680, %v680
        %v1346 = vpack.c.bf16 %v732, %v732
        %v1347 = vpack.c.bf16 %v784, %v784
        %v1348 = vpack.c.bf16 %v836, %v836
        %v1349 = vpack.c.bf16 %v932, %v932
        %v1350 = vpack.c.bf16 %v984, %v984
        %v1351 = vpack.c.bf16 %v1036, %v1036
        %v1352 = vpack.c.bf16 %v1088, %v1088
        %vm1353 = vcmask 64512
        %v1355 = vsel %vm1353, %v1345, 0
        %v1358 = vsel %vm1353, %v1349, 0
        %1360 = vmatprep.subr.bf16.mxu0 0
        %1361 = vmatpush1.bf16.xpose.msra.mxu0 %v1358
        %1362 = vmatprep.subr.bf16.mxu0 0
        %1363 = vmatpush1.bf16.xpose.msra.mxu0 0
        %1364 = vmatprep.subr.bf16.mxu0 0
        %1365 = vmatpush1.bf16.xpose.msra.mxu0 0
        %1366 = vmatprep.subr.bf16.mxu0 0
        %1367 = vmatpush1.bf16.xpose.msra.mxu0 0
        %1368 = vmatprep.subr.bf16.mxu0 0
        %1369 = vmatpush1.bf16.xpose.msra.mxu0 0
        %1370 = vmatprep.subr.bf16.mxu0 0
        %1371 = vmatpush1.bf16.xpose.msra.mxu0 0
        %1372 = vmatprep.subr.bf16.mxu0 0
        %1373 = vmatpush1.bf16.xpose.msra.mxu0 0
        %1374 = vmatprep.subr.bf16.mxu0 0
        %1375 = vmatpush1.bf16.xpose.msra.mxu0 0
        %1376 = vmatprep.subr.bf16.mxu0 0
        %1377 = vmatpush1.bf16.xpose.msra.mxu0 0
        %1378 = vmatprep.subr.bf16.mxu0 0
        %1379 = vmatpush1.bf16.xpose.msra.mxu0 0
        %1380 = vmatprep.subr.bf16.mxu0 0
        %1381 = vmatpush1.bf16.xpose.msra.mxu0 0
        %1382 = vmatprep.subr.bf16.mxu0 0
        %1383 = vmatpush1.bf16.xpose.msra.mxu0 0
        %1384 = vmatprep.subr.bf16.mxu0 0
        %1385 = vmatpush1.bf16.xpose.msra.mxu0 0
        %1386 = vmatprep.subr.bf16.mxu0 0
        %1387 = vmatpush1.bf16.xpose.msra.mxu0 0
        %1388 = vmatprep.subr.bf16.mxu0 0
        %1389 = vmatpush1.bf16.xpose.msra.mxu0 0
        %1390 = vmatprep.subr.bf16.mxu0 0
        %1391 = vmatpush1.bf16.xpose.msra.mxu0 0
        %1392 = vmatprep.mubr.bf16.mxu0 0
        %1393 = vmatmul.mubr.bf16.gmra.mrb[0].mxu0 %v1355
        %v1394 = vpop.f32.mrb[0].mxu0
        %v1395 = vadd.f32 0.0, %v1394
        %v1396 = vpop.f32.mrb[0].mxu0
        %v1397 = vpop.f32.mrb[0].mxu0
        %v1398 = vpop.f32.mrb[0].mxu0
        %1399 = vdwg.mxu0
        %v1401 = vsel %vm1353, %v1346, 0
        %v1404 = vsel %vm1353, %v1350, 0
        %1406 = vmatprep.subr.bf16.mxu0 0
        %1407 = vmatpush1.bf16.xpose.msra.mxu0 %v1404
        %1408 = vmatprep.subr.bf16.mxu0 0
        %1409 = vmatpush1.bf16.xpose.msra.mxu0 0
        %1410 = vmatprep.subr.bf16.mxu0 0
        %1411 = vmatpush1.bf16.xpose.msra.mxu0 0
        %1412 = vmatprep.subr.bf16.mxu0 0
        %1413 = vmatpush1.bf16.xpose.msra.mxu0 0
        %1414 = vmatprep.subr.bf16.mxu0 0
        %1415 = vmatpush1.bf16.xpose.msra.mxu0 0
        %1416 = vmatprep.subr.bf16.mxu0 0
        %1417 = vmatpush1.bf16.xpose.msra.mxu0 0
        %1418 = vmatprep.subr.bf16.mxu0 0
        %1419 = vmatpush1.bf16.xpose.msra.mxu0 0
        %1420 = vmatprep.subr.bf16.mxu0 0
        %1421 = vmatpush1.bf16.xpose.msra.mxu0 0
        %1422 = vmatprep.subr.bf16.mxu0 0
        %1423 = vmatpush1.bf16.xpose.msra.mxu0 0
        %1424 = vmatprep.subr.bf16.mxu0 0
        %1425 = vmatpush1.bf16.xpose.msra.mxu0 0
        %1426 = vmatprep.subr.bf16.mxu0 0
        %1427 = vmatpush1.bf16.xpose.msra.mxu0 0
        %1428 = vmatprep.subr.bf16.mxu0 0
        %1429 = vmatpush1.bf16.xpose.msra.mxu0 0
        %1430 = vmatprep.subr.bf16.mxu0 0
        %1431 = vmatpush1.bf16.xpose.msra.mxu0 0
        %1432 = vmatprep.subr.bf16.mxu0 0
        %1433 = vmatpush1.bf16.xpose.msra.mxu0 0
        %1434 = vmatprep.subr.bf16.mxu0 0
        %1435 = vmatpush1.bf16.xpose.msra.mxu0 0
        %1436 = vmatprep.subr.bf16.mxu0 0
        %1437 = vmatpush1.bf16.xpose.msra.mxu0 0
        %1438 = vmatprep.mubr.bf16.mxu0 0
        %1439 = vmatmul.mubr.bf16.gmra.mrb[0].mxu0 %v1401
        %v1440 = vpop.f32.mrb[0].mxu0
        %v1441 = vadd.f32 0.0, %v1440
        %v1442 = vpop.f32.mrb[0].mxu0
        %v1443 = vpop.f32.mrb[0].mxu0
        %v1444 = vpop.f32.mrb[0].mxu0
        %1445 = vdwg.mxu0
        %v1447 = vsel %vm1353, %v1347, 0
        %v1450 = vsel %vm1353, %v1351, 0
        %1452 = vmatprep.subr.bf16.mxu0 0
        %1453 = vmatpush1.bf16.xpose.msra.mxu0 %v1450
        %1454 = vmatprep.subr.bf16.mxu0 0
        %1455 = vmatpush1.bf16.xpose.msra.mxu0 0
        %1456 = vmatprep.subr.bf16.mxu0 0
        %1457 = vmatpush1.bf16.xpose.msra.mxu0 0
        %1458 = vmatprep.subr.bf16.mxu0 0
        %1459 = vmatpush1.bf16.xpose.msra.mxu0 0
        %1460 = vmatprep.subr.bf16.mxu0 0
        %1461 = vmatpush1.bf16.xpose.msra.mxu0 0
        %1462 = vmatprep.subr.bf16.mxu0 0
        %1463 = vmatpush1.bf16.xpose.msra.mxu0 0
        %1464 = vmatprep.subr.bf16.mxu0 0
        %1465 = vmatpush1.bf16.xpose.msra.mxu0 0
        %1466 = vmatprep.subr.bf16.mxu0 0
        %1467 = vmatpush1.bf16.xpose.msra.mxu0 0
        %1468 = vmatprep.subr.bf16.mxu0 0
        %1469 = vmatpush1.bf16.xpose.msra.mxu0 0
        %1470 = vmatprep.subr.bf16.mxu0 0
        %1471 = vmatpush1.bf16.xpose.msra.mxu0 0
        %1472 = vmatprep.subr.bf16.mxu0 0
        %1473 = vmatpush1.bf16.xpose.msra.mxu0 0
        %1474 = vmatprep.subr.bf16.mxu0 0
        %1475 = vmatpush1.bf16.xpose.msra.mxu0 0
        %1476 = vmatprep.subr.bf16.mxu0 0
        %1477 = vmatpush1.bf16.xpose.msra.mxu0 0
        %1478 = vmatprep.subr.bf16.mxu0 0
        %1479 = vmatpush1.bf16.xpose.msra.mxu0 0
        %1480 = vmatprep.subr.bf16.mxu0 0
        %1481 = vmatpush1.bf16.xpose.msra.mxu0 0
        %1482 = vmatprep.subr.bf16.mxu0 0
        %1483 = vmatpush1.bf16.xpose.msra.mxu0 0
        %1484 = vmatprep.mubr.bf16.mxu0 0
        %1485 = vmatmul.mubr.bf16.gmra.mrb[0].mxu0 %v1447
        %v1486 = vpop.f32.mrb[0].mxu0
        %v1487 = vadd.f32 0.0, %v1486
        %v1488 = vpop.f32.mrb[0].mxu0
        %v1489 = vpop.f32.mrb[0].mxu0
        %v1490 = vpop.f32.mrb[0].mxu0
        %1491 = vdwg.mxu0
        %v1493 = vsel %vm1353, %v1348, 0
        %v1496 = vsel %vm1353, %v1352, 0
        %1498 = vmatprep.subr.bf16.mxu0 0
        %1499 = vmatpush1.bf16.xpose.msra.mxu0 %v1496
        %1500 = vmatprep.subr.bf16.mxu0 0
        %1501 = vmatpush1.bf16.xpose.msra.mxu0 0
        %1502 = vmatprep.subr.bf16.mxu0 0
        %1503 = vmatpush1.bf16.xpose.msra.mxu0 0
        %1504 = vmatprep.subr.bf16.mxu0 0
        %1505 = vmatpush1.bf16.xpose.msra.mxu0 0
        %1506 = vmatprep.subr.bf16.mxu0 0
        %1507 = vmatpush1.bf16.xpose.msra.mxu0 0
        %1508 = vmatprep.subr.bf16.mxu0 0
        %1509 = vmatpush1.bf16.xpose.msra.mxu0 0
        %1510 = vmatprep.subr.bf16.mxu0 0
        %1511 = vmatpush1.bf16.xpose.msra.mxu0 0
        %1512 = vmatprep.subr.bf16.mxu0 0
        %1513 = vmatpush1.bf16.xpose.msra.mxu0 0
        %1514 = vmatprep.subr.bf16.mxu0 0
        %1515 = vmatpush1.bf16.xpose.msra.mxu0 0
        %1516 = vmatprep.subr.bf16.mxu0 0
        %1517 = vmatpush1.bf16.xpose.msra.mxu0 0
        %1518 = vmatprep.subr.bf16.mxu0 0
        %1519 = vmatpush1.bf16.xpose.msra.mxu0 0
        %1520 = vmatprep.subr.bf16.mxu0 0
        %1521 = vmatpush1.bf16.xpose.msra.mxu0 0
        %1522 = vmatprep.subr.bf16.mxu0 0
        %1523 = vmatpush1.bf16.xpose.msra.mxu0 0
        %1524 = vmatprep.subr.bf16.mxu0 0
        %1525 = vmatpush1.bf16.xpose.msra.mxu0 0
        %1526 = vmatprep.subr.bf16.mxu0 0
        %1527 = vmatpush1.bf16.xpose.msra.mxu0 0
        %1528 = vmatprep.subr.bf16.mxu0 0
        %1529 = vmatpush1.bf16.xpose.msra.mxu0 0
        %1530 = vmatprep.mubr.bf16.mxu0 0
        %1531 = vmatmul.mubr.bf16.gmra.mrb[0].mxu0 %v1493
        %v1532 = vpop.f32.mrb[0].mxu0
        %v1533 = vadd.f32 0.0, %v1532
        %v1534 = vpop.f32.mrb[0].mxu0
        %v1535 = vpop.f32.mrb[0].mxu0
        %v1536 = vpop.f32.mrb[0].mxu0
        %1537 = vdwg.mxu0
        %v1538 = vmul.f32 %v1395, 0.35355338
        %v1539 = vmul.f32 %v1441, 0.35355338
        %v1540 = vmul.f32 %v1487, 0.35355338
        %v1541 = vmul.f32 %v1533, 0.35355338
        %v1542 = vsel %vm1353, %v1538, -inf
        %1543 = vmax.xlane.f32.xlu0 %v1542
        %v1544 = vpop.xlane.xlu0 %1543
        %v1545 = vsel %vm1353, %v1539, -inf
        %1546 = vmax.xlane.f32.xlu0 %v1545
        %v1547 = vpop.xlane.xlu0 %1546
        %v1548 = vsel %vm1353, %v1540, -inf
        %1549 = vmax.xlane.f32.xlu0 %v1548
        %v1550 = vpop.xlane.xlu0 %1549
        %v1551 = vsel %vm1353, %v1541, -inf
        %1552 = vmax.xlane.f32.xlu0 %v1551
        %v1553 = vpop.xlane.xlu0 %1552
        %v1554 = vsub.f32 %v1538, %v1544
        %v1555 = vsub.f32 %v1539, %v1547
        %v1556 = vsub.f32 %v1540, %v1550
        %v1557 = vsub.f32 %v1541, %v1553
        %v1558 = vmul.f32 %v1554, 1.442695
        %v1559 = vpow.pop %v1558
        %v1560 = vmul.f32 %v1555, 1.442695
        %v1561 = vpow.pop %v1560
        %v1562 = vmul.f32 %v1556, 1.442695
        %v1563 = vpow.pop %v1562
        %v1564 = vmul.f32 %v1557, 1.442695
        %v1565 = vpow.pop %v1564
        %v1566 = vsel %vm1353, %v1559, 0.0
        %1567 = vadd.xlane.f32.xlu0 %v1566
        %v1568 = vpop.xlane.xlu0 %1567
        %v1569 = vsel %vm1353, %v1561, 0.0
        %1570 = vadd.xlane.f32.xlu0 %v1569
        %v1571 = vpop.xlane.xlu0 %1570
        %v1572 = vsel %vm1353, %v1563, 0.0
        %1573 = vadd.xlane.f32.xlu0 %v1572
        %v1574 = vpop.xlane.xlu0 %1573
        %v1575 = vsel %vm1353, %v1565, 0.0
        %1576 = vadd.xlane.f32.xlu0 %v1575
        %v1577 = vpop.xlane.xlu0 %1576
        %v1578 = vrcp.pop %v1568
        %v1579 = vrcp.pop %v1571
        %v1580 = vrcp.pop %v1574
        %v1581 = vrcp.pop %v1577
        %v1582 = vmul.f32 %v1559, %v1578
        %v1583 = vmul.f32 %v1561, %v1579
        %v1584 = vmul.f32 %v1563, %v1580
        %v1585 = vmul.f32 %v1565, %v1581
        %1586 = vst.msk [vmem:[%s577] sm:$0xff] %vm1353, %v1582
        %1587 = vst.msk [vmem:[%s577 + $0x8] sm:$0xff] %vm1353, %v1583
        %1588 = vst.msk [vmem:[%s577 + $0x10] sm:$0xff] %vm1353, %v1584
        %1589 = vst.msk [vmem:[%s577 + $0x18] sm:$0xff] %vm1353, %v1585
        %v1590 = vpack.c.bf16 %v1582, %v1582
        %v1591 = vpack.c.bf16 %v1583, %v1583
        %v1592 = vpack.c.bf16 %v1584, %v1584
        %v1593 = vpack.c.bf16 %v1585, %v1585
        %v1594 = vpack.c.bf16 %v1184, %v1184
        %v1595 = vpack.c.bf16 %v1236, %v1236
        %v1596 = vpack.c.bf16 %v1288, %v1288
        %v1597 = vpack.c.bf16 %v1340, %v1340
        %v1599 = vsel %vm1353, %v1590, 0
        %vm1601 = vcmask 1043456
        %v1603 = vsel %vm1601, %v1594, 0
        %1605 = vmatprep.subr.bf16.mxu0 0
        %1606 = vmatpush1.bf16.msra.mxu0 %v1603
        %1607 = vmatprep.subr.bf16.mxu0 0
        %1608 = vmatpush1.bf16.msra.mxu0 0
        %1609 = vmatprep.subr.bf16.mxu0 0
        %1610 = vmatpush1.bf16.msra.mxu0 0
        %1611 = vmatprep.subr.bf16.mxu0 0
        %1612 = vmatpush1.bf16.msra.mxu0 0
        %1613 = vmatprep.subr.bf16.mxu0 0
        %1614 = vmatpush1.bf16.msra.mxu0 0
        %1615 = vmatprep.subr.bf16.mxu0 0
        %1616 = vmatpush1.bf16.msra.mxu0 0
        %1617 = vmatprep.subr.bf16.mxu0 0
        %1618 = vmatpush1.bf16.msra.mxu0 0
        %1619 = vmatprep.subr.bf16.mxu0 0
        %1620 = vmatpush1.bf16.msra.mxu0 0
        %1621 = vmatprep.subr.bf16.mxu0 0
        %1622 = vmatpush1.bf16.msra.mxu0 0
        %1623 = vmatprep.subr.bf16.mxu0 0
        %1624 = vmatpush1.bf16.msra.mxu0 0
        %1625 = vmatprep.subr.bf16.mxu0 0
        %1626 = vmatpush1.bf16.msra.mxu0 0
        %1627 = vmatprep.subr.bf16.mxu0 0
        %1628 = vmatpush1.bf16.msra.mxu0 0
        %1629 = vmatprep.subr.bf16.mxu0 0
        %1630 = vmatpush1.bf16.msra.mxu0 0
        %1631 = vmatprep.subr.bf16.mxu0 0
        %1632 = vmatpush1.bf16.msra.mxu0 0
        %1633 = vmatprep.subr.bf16.mxu0 0
        %1634 = vmatpush1.bf16.msra.mxu0 0
        %1635 = vmatprep.subr.bf16.mxu0 0
        %1636 = vmatpush1.bf16.msra.mxu0 0
        %1637 = vmatprep.mubr.bf16.mxu0 0
        %1638 = vmatmul.mubr.bf16.gmra.mrb[0].mxu0 %v1599
        %v1639 = vpop.f32.mrb[0].mxu0
        %v1640 = vadd.f32 0.0, %v1639
        %v1641 = vpop.f32.mrb[0].mxu0
        %v1642 = vpop.f32.mrb[0].mxu0
        %v1643 = vpop.f32.mrb[0].mxu0
        %1644 = vdwg.mxu0
        %v1646 = vsel %vm1353, %v1591, 0
        %v1649 = vsel %vm1601, %v1595, 0
        %1651 = vmatprep.subr.bf16.mxu0 0
        %1652 = vmatpush1.bf16.msra.mxu0 %v1649
        %1653 = vmatprep.subr.bf16.mxu0 0
        %1654 = vmatpush1.bf16.msra.mxu0 0
        %1655 = vmatprep.subr.bf16.mxu0 0
        %1656 = vmatpush1.bf16.msra.mxu0 0
        %1657 = vmatprep.subr.bf16.mxu0 0
        %1658 = vmatpush1.bf16.msra.mxu0 0
        %1659 = vmatprep.subr.bf16.mxu0 0
        %1660 = vmatpush1.bf16.msra.mxu0 0
        %1661 = vmatprep.subr.bf16.mxu0 0
        %1662 = vmatpush1.bf16.msra.mxu0 0
        %1663 = vmatprep.subr.bf16.mxu0 0
        %1664 = vmatpush1.bf16.msra.mxu0 0
        %1665 = vmatprep.subr.bf16.mxu0 0
        %1666 = vmatpush1.bf16.msra.mxu0 0
        %1667 = vmatprep.subr.bf16.mxu0 0
        %1668 = vmatpush1.bf16.msra.mxu0 0
        %1669 = vmatprep.subr.bf16.mxu0 0
        %1670 = vmatpush1.bf16.msra.mxu0 0
        %1671 = vmatprep.subr.bf16.mxu0 0
        %1672 = vmatpush1.bf16.msra.mxu0 0
        %1673 = vmatprep.subr.bf16.mxu0 0
        %1674 = vmatpush1.bf16.msra.mxu0 0
        %1675 = vmatprep.subr.bf16.mxu0 0
        %1676 = vmatpush1.bf16.msra.mxu0 0
        %1677 = vmatprep.subr.bf16.mxu0 0
        %1678 = vmatpush1.bf16.msra.mxu0 0
        %1679 = vmatprep.subr.bf16.mxu0 0
        %1680 = vmatpush1.bf16.msra.mxu0 0
        %1681 = vmatprep.subr.bf16.mxu0 0
        %1682 = vmatpush1.bf16.msra.mxu0 0
        %1683 = vmatprep.mubr.bf16.mxu0 0
        %1684 = vmatmul.mubr.bf16.gmra.mrb[0].mxu0 %v1646
        %v1685 = vpop.f32.mrb[0].mxu0
        %v1686 = vadd.f32 0.0, %v1685
        %v1687 = vpop.f32.mrb[0].mxu0
        %v1688 = vpop.f32.mrb[0].mxu0
        %v1689 = vpop.f32.mrb[0].mxu0
        %1690 = vdwg.mxu0
        %v1692 = vsel %vm1353, %v1592, 0
        %v1695 = vsel %vm1601, %v1596, 0
        %1697 = vmatprep.subr.bf16.mxu0 0
        %1698 = vmatpush1.bf16.msra.mxu0 %v1695
        %1699 = vmatprep.subr.bf16.mxu0 0
        %1700 = vmatpush1.bf16.msra.mxu0 0
        %1701 = vmatprep.subr.bf16.mxu0 0
        %1702 = vmatpush1.bf16.msra.mxu0 0
        %1703 = vmatprep.subr.bf16.mxu0 0
        %1704 = vmatpush1.bf16.msra.mxu0 0
        %1705 = vmatprep.subr.bf16.mxu0 0
        %1706 = vmatpush1.bf16.msra.mxu0 0
        %1707 = vmatprep.subr.bf16.mxu0 0
        %1708 = vmatpush1.bf16.msra.mxu0 0
        %1709 = vmatprep.subr.bf16.mxu0 0
        %1710 = vmatpush1.bf16.msra.mxu0 0
        %1711 = vmatprep.subr.bf16.mxu0 0
        %1712 = vmatpush1.bf16.msra.mxu0 0
        %1713 = vmatprep.subr.bf16.mxu0 0
        %1714 = vmatpush1.bf16.msra.mxu0 0
        %1715 = vmatprep.subr.bf16.mxu0 0
        %1716 = vmatpush1.bf16.msra.mxu0 0
        %1717 = vmatprep.subr.bf16.mxu0 0
        %1718 = vmatpush1.bf16.msra.mxu0 0
        %1719 = vmatprep.subr.bf16.mxu0 0
        %1720 = vmatpush1.bf16.msra.mxu0 0
        %1721 = vmatprep.subr.bf16.mxu0 0
        %1722 = vmatpush1.bf16.msra.mxu0 0
        %1723 = vmatprep.subr.bf16.mxu0 0
        %1724 = vmatpush1.bf16.msra.mxu0 0
        %1725 = vmatprep.subr.bf16.mxu0 0
        %1726 = vmatpush1.bf16.msra.mxu0 0
        %1727 = vmatprep.subr.bf16.mxu0 0
        %1728 = vmatpush1.bf16.msra.mxu0 0
        %1729 = vmatprep.mubr.bf16.mxu0 0
        %1730 = vmatmul.mubr.bf16.gmra.mrb[0].mxu0 %v1692
        %v1731 = vpop.f32.mrb[0].mxu0
        %v1732 = vadd.f32 0.0, %v1731
        %v1733 = vpop.f32.mrb[0].mxu0
        %v1734 = vpop.f32.mrb[0].mxu0
        %v1735 = vpop.f32.mrb[0].mxu0
        %1736 = vdwg.mxu0
        %v1738 = vsel %vm1353, %v1593, 0
        %v1741 = vsel %vm1601, %v1597, 0
        %1743 = vmatprep.subr.bf16.mxu0 0
        %1744 = vmatpush1.bf16.msra.mxu0 %v1741
        %1745 = vmatprep.subr.bf16.mxu0 0
        %1746 = vmatpush1.bf16.msra.mxu0 0
        %1747 = vmatprep.subr.bf16.mxu0 0
        %1748 = vmatpush1.bf16.msra.mxu0 0
        %1749 = vmatprep.subr.bf16.mxu0 0
        %1750 = vmatpush1.bf16.msra.mxu0 0
        %1751 = vmatprep.subr.bf16.mxu0 0
        %1752 = vmatpush1.bf16.msra.mxu0 0
        %1753 = vmatprep.subr.bf16.mxu0 0
        %1754 = vmatpush1.bf16.msra.mxu0 0
        %1755 = vmatprep.subr.bf16.mxu0 0
        %1756 = vmatpush1.bf16.msra.mxu0 0
        %1757 = vmatprep.subr.bf16.mxu0 0
        %1758 = vmatpush1.bf16.msra.mxu0 0
        %1759 = vmatprep.subr.bf16.mxu0 0
        %1760 = vmatpush1.bf16.msra.mxu0 0
        %1761 = vmatprep.subr.bf16.mxu0 0
        %1762 = vmatpush1.bf16.msra.mxu0 0
        %1763 = vmatprep.subr.bf16.mxu0 0
        %1764 = vmatpush1.bf16.msra.mxu0 0
        %1765 = vmatprep.subr.bf16.mxu0 0
        %1766 = vmatpush1.bf16.msra.mxu0 0
        %1767 = vmatprep.subr.bf16.mxu0 0
        %1768 = vmatpush1.bf16.msra.mxu0 0
        %1769 = vmatprep.subr.bf16.mxu0 0
        %1770 = vmatpush1.bf16.msra.mxu0 0
        %1771 = vmatprep.subr.bf16.mxu0 0
        %1772 = vmatpush1.bf16.msra.mxu0 0
        %1773 = vmatprep.subr.bf16.mxu0 0
        %1774 = vmatpush1.bf16.msra.mxu0 0
        %1775 = vmatprep.mubr.bf16.mxu0 0
        %1776 = vmatmul.mubr.bf16.gmra.mrb[0].mxu0 %v1738
        %v1777 = vpop.f32.mrb[0].mxu0
        %v1778 = vadd.f32 0.0, %v1777
        %v1779 = vpop.f32.mrb[0].mxu0
        %v1780 = vpop.f32.mrb[0].mxu0
        %v1781 = vpop.f32.mrb[0].mxu0
        %1782 = vdwg.mxu0
        %v1783 = vpack.c.bf16 %v1640, %v1640
        %v1784 = vpack.c.bf16 %v1686, %v1686
        %v1785 = vpack.c.bf16 %v1732, %v1732
        %v1786 = vpack.c.bf16 %v1778, %v1778
        %v1787 = vld [vmem:[%s7] sm:$0xf]
        %v1788 = vld [vmem:[%s7 + $0x4] sm:$0xf]
        %v1789 = vld [vmem:[%s7 + $0x8] sm:$0xf]
        %v1790 = vld [vmem:[%s7 + $0xc] sm:$0xf]
        %v1792 = vsel %vm1353, %v1783, 0
        %v1795 = vsel %vm1601, %v1787, 0
        %1797 = vmatprep.subr.bf16.mxu0 0
        %1798 = vmatpush1.bf16.msra.mxu0 %v1795
        %1799 = vmatprep.subr.bf16.mxu0 0
        %1800 = vmatpush1.bf16.msra.mxu0 0
        %1801 = vmatprep.subr.bf16.mxu0 0
        %1802 = vmatpush1.bf16.msra.mxu0 0
        %1803 = vmatprep.subr.bf16.mxu0 0
        %1804 = vmatpush1.bf16.msra.mxu0 0
        %1805 = vmatprep.subr.bf16.mxu0 0
        %1806 = vmatpush1.bf16.msra.mxu0 0
        %1807 = vmatprep.subr.bf16.mxu0 0
        %1808 = vmatpush1.bf16.msra.mxu0 0
        %1809 = vmatprep.subr.bf16.mxu0 0
        %1810 = vmatpush1.bf16.msra.mxu0 0
        %1811 = vmatprep.subr.bf16.mxu0 0
        %1812 = vmatpush1.bf16.msra.mxu0 0
        %1813 = vmatprep.subr.bf16.mxu0 0
        %1814 = vmatpush1.bf16.msra.mxu0 0
        %1815 = vmatprep.subr.bf16.mxu0 0
        %1816 = vmatpush1.bf16.msra.mxu0 0
        %1817 = vmatprep.subr.bf16.mxu0 0
        %1818 = vmatpush1.bf16.msra.mxu0 0
        %1819 = vmatprep.subr.bf16.mxu0 0
        %1820 = vmatpush1.bf16.msra.mxu0 0
        %1821 = vmatprep.subr.bf16.mxu0 0
        %1822 = vmatpush1.bf16.msra.mxu0 0
        %1823 = vmatprep.subr.bf16.mxu0 0
        %1824 = vmatpush1.bf16.msra.mxu0 0
        %1825 = vmatprep.subr.bf16.mxu0 0
        %1826 = vmatpush1.bf16.msra.mxu0 0
        %1827 = vmatprep.subr.bf16.mxu0 0
        %1828 = vmatpush1.bf16.msra.mxu0 0
        %1829 = vmatprep.mubr.bf16.mxu0 0
        %1830 = vmatmul.mubr.bf16.gmra.mrb[0].mxu0 %v1792
        %v1831 = vpop.f32.mrb[0].mxu0
        %v1832 = vadd.f32 0.0, %v1831
        %v1833 = vpop.f32.mrb[0].mxu0
        %v1834 = vpop.f32.mrb[0].mxu0
        %v1835 = vpop.f32.mrb[0].mxu0
        %1836 = vdwg.mxu0
        %v1838 = vsel %vm1353, %v1784, 0
        %v1841 = vsel %vm1601, %v1788, 0
        %1843 = vmatprep.subr.bf16.mxu0 0
        %1844 = vmatpush1.bf16.msra.mxu0 %v1841
        %1845 = vmatprep.subr.bf16.mxu0 0
        %1846 = vmatpush1.bf16.msra.mxu0 0
        %1847 = vmatprep.subr.bf16.mxu0 0
        %1848 = vmatpush1.bf16.msra.mxu0 0
        %1849 = vmatprep.subr.bf16.mxu0 0
        %1850 = vmatpush1.bf16.msra.mxu0 0
        %1851 = vmatprep.subr.bf16.mxu0 0
        %1852 = vmatpush1.bf16.msra.mxu0 0
        %1853 = vmatprep.subr.bf16.mxu0 0
        %1854 = vmatpush1.bf16.msra.mxu0 0
        %1855 = vmatprep.subr.bf16.mxu0 0
        %1856 = vmatpush1.bf16.msra.mxu0 0
        %1857 = vmatprep.subr.bf16.mxu0 0
        %1858 = vmatpush1.bf16.msra.mxu0 0
        %1859 = vmatprep.subr.bf16.mxu0 0
        %1860 = vmatpush1.bf16.msra.mxu0 0
        %1861 = vmatprep.subr.bf16.mxu0 0
        %1862 = vmatpush1.bf16.msra.mxu0 0
        %1863 = vmatprep.subr.bf16.mxu0 0
        %1864 = vmatpush1.bf16.msra.mxu0 0
        %1865 = vmatprep.subr.bf16.mxu0 0
        %1866 = vmatpush1.bf16.msra.mxu0 0
        %1867 = vmatprep.subr.bf16.mxu0 0
        %1868 = vmatpush1.bf16.msra.mxu0 0
        %1869 = vmatprep.subr.bf16.mxu0 0
        %1870 = vmatpush1.bf16.msra.mxu0 0
        %1871 = vmatprep.subr.bf16.mxu0 0
        %1872 = vmatpush1.bf16.msra.mxu0 0
        %1873 = vmatprep.subr.bf16.mxu0 0
        %1874 = vmatpush1.bf16.msra.mxu0 0
        %1875 = vmatprep.mubr.bf16.mxu0 0
        %1876 = vmatmul.mubr.bf16.gmra.mrb[0].mxu0 %v1838
        %v1877 = vpop.f32.mrb[0].mxu0
        %v1878 = vadd.f32 0.0, %v1877
        %v1879 = vpop.f32.mrb[0].mxu0
        %v1880 = vpop.f32.mrb[0].mxu0
        %v1881 = vpop.f32.mrb[0].mxu0
        %1882 = vdwg.mxu0
        %v1884 = vsel %vm1353, %v1785, 0
        %v1887 = vsel %vm1601, %v1789, 0
        %1889 = vmatprep.subr.bf16.mxu0 0
        %1890 = vmatpush1.bf16.msra.mxu0 %v1887
        %1891 = vmatprep.subr.bf16.mxu0 0
        %1892 = vmatpush1.bf16.msra.mxu0 0
        %1893 = vmatprep.subr.bf16.mxu0 0
        %1894 = vmatpush1.bf16.msra.mxu0 0
        %1895 = vmatprep.subr.bf16.mxu0 0
        %1896 = vmatpush1.bf16.msra.mxu0 0
        %1897 = vmatprep.subr.bf16.mxu0 0
        %1898 = vmatpush1.bf16.msra.mxu0 0
        %1899 = vmatprep.subr.bf16.mxu0 0
        %1900 = vmatpush1.bf16.msra.mxu0 0
        %1901 = vmatprep.subr.bf16.mxu0 0
        %1902 = vmatpush1.bf16.msra.mxu0 0
        %1903 = vmatprep.subr.bf16.mxu0 0
        %1904 = vmatpush1.bf16.msra.mxu0 0
        %1905 = vmatprep.subr.bf16.mxu0 0
        %1906 = vmatpush1.bf16.msra.mxu0 0
        %1907 = vmatprep.subr.bf16.mxu0 0
        %1908 = vmatpush1.bf16.msra.mxu0 0
        %1909 = vmatprep.subr.bf16.mxu0 0
        %1910 = vmatpush1.bf16.msra.mxu0 0
        %1911 = vmatprep.subr.bf16.mxu0 0
        %1912 = vmatpush1.bf16.msra.mxu0 0
        %1913 = vmatprep.subr.bf16.mxu0 0
        %1914 = vmatpush1.bf16.msra.mxu0 0
        %1915 = vmatprep.subr.bf16.mxu0 0
        %1916 = vmatpush1.bf16.msra.mxu0 0
        %1917 = vmatprep.subr.bf16.mxu0 0
        %1918 = vmatpush1.bf16.msra.mxu0 0
        %1919 = vmatprep.subr.bf16.mxu0 0
        %1920 = vmatpush1.bf16.msra.mxu0 0
        %1921 = vmatprep.mubr.bf16.mxu0 0
        %1922 = vmatmul.mubr.bf16.gmra.mrb[0].mxu0 %v1884
        %v1923 = vpop.f32.mrb[0].mxu0
        %v1924 = vadd.f32 0.0, %v1923
        %v1925 = vpop.f32.mrb[0].mxu0
        %v1926 = vpop.f32.mrb[0].mxu0
        %v1927 = vpop.f32.mrb[0].mxu0
        %1928 = vdwg.mxu0
        %v1930 = vsel %vm1353, %v1786, 0
        %v1933 = vsel %vm1601, %v1790, 0
        %1935 = vmatprep.subr.bf16.mxu0 0
        %1936 = vmatpush1.bf16.msra.mxu0 %v1933
        %1937 = vmatprep.subr.bf16.mxu0 0
        %1938 = vmatpush1.bf16.msra.mxu0 0
        %1939 = vmatprep.subr.bf16.mxu0 0
        %1940 = vmatpush1.bf16.msra.mxu0 0
        %1941 = vmatprep.subr.bf16.mxu0 0
        %1942 = vmatpush1.bf16.msra.mxu0 0
        %1943 = vmatprep.subr.bf16.mxu0 0
        %1944 = vmatpush1.bf16.msra.mxu0 0
        %1945 = vmatprep.subr.bf16.mxu0 0
        %1946 = vmatpush1.bf16.msra.mxu0 0
        %1947 = vmatprep.subr.bf16.mxu0 0
        %1948 = vmatpush1.bf16.msra.mxu0 0
        %1949 = vmatprep.subr.bf16.mxu0 0
        %1950 = vmatpush1.bf16.msra.mxu0 0
        %1951 = vmatprep.subr.bf16.mxu0 0
        %1952 = vmatpush1.bf16.msra.mxu0 0
        %1953 = vmatprep.subr.bf16.mxu0 0
        %1954 = vmatpush1.bf16.msra.mxu0 0
        %1955 = vmatprep.subr.bf16.mxu0 0
        %1956 = vmatpush1.bf16.msra.mxu0 0
        %1957 = vmatprep.subr.bf16.mxu0 0
        %1958 = vmatpush1.bf16.msra.mxu0 0
        %1959 = vmatprep.subr.bf16.mxu0 0
        %1960 = vmatpush1.bf16.msra.mxu0 0
        %1961 = vmatprep.subr.bf16.mxu0 0
        %1962 = vmatpush1.bf16.msra.mxu0 0
        %1963 = vmatprep.subr.bf16.mxu0 0
        %1964 = vmatpush1.bf16.msra.mxu0 0
        %1965 = vmatprep.subr.bf16.mxu0 0
        %1966 = vmatpush1.bf16.msra.mxu0 0
        %1967 = vmatprep.mubr.bf16.mxu0 0
        %1968 = vmatmul.mubr.bf16.gmra.mrb[0].mxu0 %v1930
        %v1969 = vpop.f32.mrb[0].mxu0
        %v1970 = vadd.f32 0.0, %v1969
        %v1971 = vpop.f32.mrb[0].mxu0
        %v1972 = vpop.f32.mrb[0].mxu0
        %v1973 = vpop.f32.mrb[0].mxu0
        %1974 = vdwg.mxu0
        %v1975 = vsel %vm641, %v1832, 0.0
        %v1976 = vsel %vm641, %v1878, 0.0
        %v1977 = vadd.f32 %v1975, %v1976
        %v1978 = vsel %vm641, %v1924, 0.0
        %v1979 = vadd.f32 %v1977, %v1978
        %v1980 = vsel %vm641, %v1970, 0.0
        %v1981 = vadd.f32 %v1979, %v1980
        %v1982 = vld [vmem:[%s8] sm:$0x1]
        %v1984 = vlaneseq
        %v1985 = vshrl.u32 %v1984, 7
        %v1986 = vsub.s32 0, %v1985
        %v1987 = vrot.slane %v1982, %v1986
        %v1989 = vadd.f32 %v1981, %v1987
        %v1990 = vadd.f32 %v583, %v1989
        %v1991 = vsel %vm641, %v1990, 0.0
        %1992 = vadd.xlane.f32.xlu0 %v1991
        %v1993 = vpop.xlane.xlu0 %1992
        %v1994 = vrcp.pop 32.0
        %v1995 = vmul.f32 %v1993, %v1994
        %v1996 = vsub.f32 %v1990, %v1995
        %v1997 = vmul.f32 %v1996, %v1996
        %v1998 = vsel %vm641, %v1997, 0.0
        %1999 = vadd.xlane.f32.xlu0 %v1998
        %v2000 = vpop.xlane.xlu0 %1999
        %v2001 = vmul.f32 %v2000, %v1994
        %v2002 = vadd.f32 %v2001, 1e-05
        %v2003 = vrsqrt.pop %v2002
        %v2004 = vmul.f32 %v1996, %v2003
        %v2005 = vld [vmem:[%s9] sm:$0x1]
        %v2007 = vlaneseq
        %v2008 = vshrl.u32 %v2007, 7
        %v2009 = vsub.s32 0, %v2008
        %v2010 = vrot.slane %v2005, %v2009
        %v2012 = vmul.f32 %v2004, %v2010
        %v2013 = vld [vmem:[%s10] sm:$0x1]
        %v2015 = vlaneseq
        %v2016 = vshrl.u32 %v2015, 7
        %v2017 = vsub.s32 0, %v2016
        %v2018 = vrot.slane %v2013, %v2017
        %v2020 = vadd.f32 %v2012, %v2018
        %v2021 = vpack.c.bf16 %v2020, %v2020
        %v2022 = vld [vmem:[%s11] sm:$0xf]
        %v2023 = vld [vmem:[%s11 + $0x4] sm:$0xf]
        %v2024 = vld [vmem:[%s11 + $0x8] sm:$0xf]
        %v2025 = vld [vmem:[%s11 + $0xc] sm:$0xf]
        %v2026 = vld [vmem:[%s12] sm:$0x1]
        %v2028 = vlaneseq
        %v2029 = vshrl.u32 %v2028, 7
        %v2030 = vsub.s32 0, %v2029
        %v2031 = vrot.slane %v2026, %v2030
        %v2037 = vunpack.c.l.b16 %v2022
        %v2038 = vunpack.c.l.b16 %v2023
        %v2039 = vunpack.c.l.b16 %v2024
        %v2040 = vunpack.c.l.b16 %v2025
        %v2041 = vpack.c.b16 %v2038, %v2037
        %v2042 = vpack.c.b16 %v2040, %v2039
        %v2046 = vsel %vm641, %v2021, 0
        %2048 = vmatprep.subr.bf16.mxu0 0
        %2049 = vmatpush1.bf16.msra.mxu0 %v2041
        %2050 = vmatprep.subr.bf16.mxu0 0
        %2051 = vmatpush1.bf16.msra.mxu0 %v2042
        %2052 = vmatprep.subr.bf16.mxu0 0
        %2053 = vmatpush1.bf16.msra.mxu0 0
        %2054 = vmatprep.subr.bf16.mxu0 0
        %2055 = vmatpush1.bf16.msra.mxu0 0
        %2056 = vmatprep.subr.bf16.mxu0 0
        %2057 = vmatpush1.bf16.msra.mxu0 0
        %2058 = vmatprep.subr.bf16.mxu0 0
        %2059 = vmatpush1.bf16.msra.mxu0 0
        %2060 = vmatprep.subr.bf16.mxu0 0
        %2061 = vmatpush1.bf16.msra.mxu0 0
        %2062 = vmatprep.subr.bf16.mxu0 0
        %2063 = vmatpush1.bf16.msra.mxu0 0
        %2064 = vmatprep.subr.bf16.mxu0 0
        %2065 = vmatpush1.bf16.msra.mxu0 0
        %2066 = vmatprep.subr.bf16.mxu0 0
        %2067 = vmatpush1.bf16.msra.mxu0 0
        %2068 = vmatprep.subr.bf16.mxu0 0
        %2069 = vmatpush1.bf16.msra.mxu0 0
        %2070 = vmatprep.subr.bf16.mxu0 0
        %2071 = vmatpush1.bf16.msra.mxu0 0
        %2072 = vmatprep.subr.bf16.mxu0 0
        %2073 = vmatpush1.bf16.msra.mxu0 0
        %2074 = vmatprep.subr.bf16.mxu0 0
        %2075 = vmatpush1.bf16.msra.mxu0 0
        %2076 = vmatprep.subr.bf16.mxu0 0
        %2077 = vmatpush1.bf16.msra.mxu0 0
        %2078 = vmatprep.subr.bf16.mxu0 0
        %2079 = vmatpush1.bf16.msra.mxu0 0
        %2080 = vmatprep.mubr.bf16.mxu0 0
        %2081 = vmatmul.mubr.bf16.gmra.mrb[0].mxu0 %v2046
        %v2082 = vpop.f32.mrb[0].mxu0
        %v2083 = vadd.f32 %v2031, %v2082
        %v2084 = vpop.f32.mrb[0].mxu0
        %v2085 = vpop.f32.mrb[0].mxu0
        %v2086 = vpop.f32.mrb[0].mxu0
        %2087 = vdwg.mxu0
        %v2088 = vmul.f32 %v2083, 0.5
        %v2089 = vmul.f32 %v2083, 0.70710677
        %v2090 = verf.f32.pop %v2089
        %v2091 = vadd.f32 %v2090, 1.0
        %v2092 = vmul.f32 %v2088, %v2091
        %v2093 = vpack.c.bf16 %v2092, %v2092
        %v2094 = vld [vmem:[%s13] sm:$0xf]
        %v2095 = vld [vmem:[%s13 + $0x4] sm:$0xf]
        %v2096 = vld [vmem:[%s13 + $0x8] sm:$0xf]
        %v2097 = vld [vmem:[%s13 + $0xc] sm:$0xf]
        %v2098 = vld [vmem:[%s13 + $0x10] sm:$0xf]
        %v2099 = vld [vmem:[%s13 + $0x14] sm:$0xf]
        %v2100 = vld [vmem:[%s13 + $0x18] sm:$0xf]
        %v2101 = vld [vmem:[%s13 + $0x1c] sm:$0xf]
        %v2102 = vld [vmem:[%s13 + $0x20] sm:$0xf]
        %v2103 = vld [vmem:[%s13 + $0x24] sm:$0xf]
        %v2104 = vld [vmem:[%s13 + $0x28] sm:$0xf]
        %v2105 = vld [vmem:[%s13 + $0x2c] sm:$0xf]
        %v2106 = vld [vmem:[%s13 + $0x30] sm:$0xf]
        %v2107 = vld [vmem:[%s13 + $0x34] sm:$0xf]
        %v2108 = vld [vmem:[%s13 + $0x38] sm:$0xf]
        %v2109 = vld [vmem:[%s13 + $0x3c] sm:$0xf]
        %v2110 = vld [vmem:[%s14] sm:$0x1]
        %v2112 = vlaneseq
        %v2113 = vshrl.u32 %v2112, 7
        %v2114 = vsub.s32 0, %v2113
        %v2115 = vrot.slane %v2110, %v2114
        %v2133 = vunpack.c.l.b16 %v2094
        %v2134 = vunpack.c.l.b16 %v2095
        %v2135 = vunpack.c.l.b16 %v2096
        %v2136 = vunpack.c.l.b16 %v2097
        %v2137 = vunpack.c.l.b16 %v2098
        %v2138 = vunpack.c.l.b16 %v2099
        %v2139 = vunpack.c.l.b16 %v2100
        %v2140 = vunpack.c.l.b16 %v2101
        %v2141 = vunpack.c.l.b16 %v2102
        %v2142 = vunpack.c.l.b16 %v2103
        %v2143 = vunpack.c.l.b16 %v2104
        %v2144 = vunpack.c.l.b16 %v2105
        %v2145 = vunpack.c.l.b16 %v2106
        %v2146 = vunpack.c.l.b16 %v2107
        %v2147 = vunpack.c.l.b16 %v2108
        %v2148 = vunpack.c.l.b16 %v2109
        %v2149 = vpack.c.b16 %v2134, %v2133
        %v2150 = vpack.c.b16 %v2136, %v2135
        %v2151 = vpack.c.b16 %v2138, %v2137
        %v2152 = vpack.c.b16 %v2140, %v2139
        %v2153 = vpack.c.b16 %v2142, %v2141
        %v2154 = vpack.c.b16 %v2144, %v2143
        %v2155 = vpack.c.b16 %v2146, %v2145
        %v2156 = vpack.c.b16 %v2148, %v2147
        %2165 = vmatprep.subr.bf16.mxu0 0
        %2166 = vmatpush1.bf16.msra.mxu0 %v2149
        %2167 = vmatprep.subr.bf16.mxu0 0
        %2168 = vmatpush1.bf16.msra.mxu0 %v2150
        %2169 = vmatprep.subr.bf16.mxu0 0
        %2170 = vmatpush1.bf16.msra.mxu0 %v2151
        %2171 = vmatprep.subr.bf16.mxu0 0
        %2172 = vmatpush1.bf16.msra.mxu0 %v2152
        %2173 = vmatprep.subr.bf16.mxu0 0
        %2174 = vmatpush1.bf16.msra.mxu0 %v2153
        %2175 = vmatprep.subr.bf16.mxu0 0
        %2176 = vmatpush1.bf16.msra.mxu0 %v2154
        %2177 = vmatprep.subr.bf16.mxu0 0
        %2178 = vmatpush1.bf16.msra.mxu0 %v2155
        %2179 = vmatprep.subr.bf16.mxu0 0
        %2180 = vmatpush1.bf16.msra.mxu0 %v2156
        %2181 = vmatprep.subr.bf16.mxu0 0
        %2182 = vmatpush1.bf16.msra.mxu0 0
        %2183 = vmatprep.subr.bf16.mxu0 0
        %2184 = vmatpush1.bf16.msra.mxu0 0
        %2185 = vmatprep.subr.bf16.mxu0 0
        %2186 = vmatpush1.bf16.msra.mxu0 0
        %2187 = vmatprep.subr.bf16.mxu0 0
        %2188 = vmatpush1.bf16.msra.mxu0 0
        %2189 = vmatprep.subr.bf16.mxu0 0
        %2190 = vmatpush1.bf16.msra.mxu0 0
        %2191 = vmatprep.subr.bf16.mxu0 0
        %2192 = vmatpush1.bf16.msra.mxu0 0
        %2193 = vmatprep.subr.bf16.mxu0 0
        %2194 = vmatpush1.bf16.msra.mxu0 0
        %2195 = vmatprep.subr.bf16.mxu0 0
        %2196 = vmatpush1.bf16.msra.mxu0 0
        %2197 = vmatprep.mubr.bf16.mxu0 0
        %2198 = vmatmul.mubr.bf16.gmra.mrb[0].mxu0 %v2093
        %v2199 = vpop.f32.mrb[0].mxu0
        %v2200 = vadd.f32 %v2115, %v2199
        %v2201 = vpop.f32.mrb[0].mxu0
        %v2202 = vpop.f32.mrb[0].mxu0
        %v2203 = vpop.f32.mrb[0].mxu0
        %2204 = vdwg.mxu0
        %v2205 = vadd.f32 %v2020, %v2200
        %v2206 = vsel %vm641, %v2205, 0.0
        %2207 = vadd.xlane.f32.xlu0 %v2206
        %v2208 = vpop.xlane.xlu0 %2207
        %v2209 = vmul.f32 %v2208, %v1994
        %v2210 = vsub.f32 %v2205, %v2209
        %v2211 = vmul.f32 %v2210, %v2210
        %v2212 = vsel %vm641, %v2211, 0.0
        %2213 = vadd.xlane.f32.xlu0 %v2212
        %v2214 = vpop.xlane.xlu0 %2213
        %v2215 = vmul.f32 %v2214, %v1994
        %v2216 = vadd.f32 %v2215, 1e-05
        %v2217 = vrsqrt.pop %v2216
        %v2218 = vmul.f32 %v2210, %v2217
        %v2219 = vld [vmem:[%s15] sm:$0x1]
        %v2221 = vlaneseq
        %v2222 = vshrl.u32 %v2221, 7
        %v2223 = vsub.s32 0, %v2222
        %v2224 = vrot.slane %v2219, %v2223
        %v2226 = vmul.f32 %v2218, %v2224
        %v2227 = vld [vmem:[%s16] sm:$0x1]
        %v2229 = vlaneseq
        %v2230 = vshrl.u32 %v2229, 7
        %v2231 = vsub.s32 0, %v2230
        %v2232 = vrot.slane %v2227, %v2231
        %v2234 = vadd.f32 %v2226, %v2232
        %2235 = vst.msk [vmem:[%s570] sm:$0xff] %vm641, %v2234
        %s2236 = sand.u32 %s406, 1
        %s2237 = scalar_lea.sflag [#allocation3], %s2236
        %s2238 = sand.u32 %s406, 1
        %s2239 = smul.addr %s2238, 8
        %s2240 = scalar_lea.vmem [#allocation2], %s2239
        %s2241 = sand.u32 %s432, 1
        %s2242 = scalar_lea.sflag [#allocation5], %s2241
        %s2243 = sand.u32 %s432, 1
        %s2244 = smul.addr %s2243, 32
        %s2245 = scalar_lea.vmem [#allocation4], %s2244
        // Predicated region
        $region89: #{tpu_custom_call.1} parent=87 // pred_check
          %p2246 = pneg %p416
        $region90: #{tpu_custom_call.1} parent=87 // pred_check_branch
          %2248 = sbr.rel (%p2246) target = $region92
        $region91: #{tpu_custom_call.1} parent=87 // pred_region
          %s2250 = ssub.s32 128, 128
          %2251 = vsyncadd %s2237, %s2250
          %s2252 = smul.addr %s36, 128
          %s2253 = scalar_lea.hbm %s17, %s2252
          %s2255 = sshll.u32 %s2240, 4
          %s2256 = int_to_ptr.vmem [resolvable:$true] %s2255
          %2258 = dma.vmem_to_hbm [thread:$0]  %s2256, 128, %s2253, %s2237
        $region92: #{tpu_custom_call.1} parent=87 // pred_fallthru
          _
        // Predicated region
        $region93: #{tpu_custom_call.1} parent=87 // pred_check
          %p2259 = pneg %p442
        $region94: #{tpu_custom_call.1} parent=87 // pred_check_branch
          %2261 = sbr.rel (%p2259) target = $region96
        $region95: #{tpu_custom_call.1} parent=87 // pred_region
          %s2263 = ssub.s32 512, 512
          %2264 = vsyncadd %s2242, %s2263
          %s2265 = smul.addr %s36, 4
          %s2266 = smul.addr %s2265, 128
          %s2267 = scalar_lea.hbm %s18, %s2266
          %s2268 = sshll.u32 %s2245, 4
          %s2269 = int_to_ptr.vmem [resolvable:$true] %s2268
          %2274 = dma.vmem_to_hbm [thread:$0]  %s2269, 512, %s2267, %s2242, 128, 128, 8
        $region96: #{tpu_custom_call.1} parent=87 // pred_fallthru
          _
      $region88: #{tpu_custom_call.1} parent=5 // pred_fallthru
        _
      %p2275 = scmp.le.s32.totalorder 2, %s31
      // Predicated region
      $region97: #{tpu_custom_call.1} parent=5 // pred_check
        %p2276 = pneg %p2275
      $region98: #{tpu_custom_call.1} parent=5 // pred_check_branch
        %2278 = sbr.rel (%p2276) target = $region100
      $region99: #{tpu_custom_call.1} parent=5 // pred_region
        %s2279 = ssub.s32 %s31, 2
        // Predicated region
        $region101: #{tpu_custom_call.1} parent=99 // pred_check
          %p2280 = pneg %p422
        $region102: #{tpu_custom_call.1} parent=99 // pred_check_branch
          %2282 = sbr.rel (%p2280) target = $region104
        $region103: #{tpu_custom_call.1} parent=99 // pred_region
          %s2283 = sand.u32 %s407, 1
          %s2284 = scalar_lea.sflag [#allocation3], %s2283
          %s2285 = sand.u32 %s407, 1
          %s2286 = smul.addr %s2285, 8
          %s2287 = scalar_lea.vmem [#allocation2], %s2286
          %2288 = dma.done %s2284, 128
        $region104: #{tpu_custom_call.1} parent=99 // pred_fallthru
          _
        // Predicated region
        $region105: #{tpu_custom_call.1} parent=99 // pred_check
          %p2289 = pneg %p448
        $region106: #{tpu_custom_call.1} parent=99 // pred_check_branch
          %2291 = sbr.rel (%p2289) target = $region108
        $region107: #{tpu_custom_call.1} parent=99 // pred_region
          %s2292 = sand.u32 %s433, 1
          %s2293 = scalar_lea.sflag [#allocation5], %s2292
          %s2294 = sand.u32 %s433, 1
          %s2295 = smul.addr %s2294, 32
          %s2296 = scalar_lea.vmem [#allocation4], %s2295
          %2297 = dma.done %s2293, 512
        $region108: #{tpu_custom_call.1} parent=99 // pred_fallthru
          _
      $region100: #{tpu_custom_call.1} parent=5 // pred_fallthru
        _
    $region6: #{tpu_custom_call.1} parent=1 // loop_footer
      %s35 = sadd.s32 1, %s31
    $region7: #{tpu_custom_call.1} parent=1 // loop_footer_branch
      %30 = sbr.rel target = $region3
    $region8: #{tpu_custom_call.1} parent=1 // loop_exit
      _
    %2298 = vsyncpa [#allocation3], 1
    %s2299 = scalar_lea.sflag [#allocation3], 1
    %2300 = vsyncpa %s2299, 1
    %2301 = vsyncpa [#allocation5], 1
    %s2302 = scalar_lea.sflag [#allocation5], 1
    %2303 = vsyncpa %s2302, 1

</llo_original>
